<compile_context>
chip_gen: v6e
topology: v6e:2x2x1
jax: 0.10.0
libtpu: 0.0.40
codegen_flags: <defaults>
</compile_context>

<pallas_src>
import numpy as np
import jax
import jax.numpy as jnp
from jax.experimental import pallas as pl
from jax.experimental.pallas import tpu as pltpu


def round_up(x, m):
    return ((x + m - 1) // m) * m


def _device_budget():
    """Generation-aware (vmem_limit_bytes, default R tile)."""
    try:
        info = pltpu.get_tpu_info()
        cap = int(getattr(info, "vmem_capacity_bytes", 64 * 1024 * 1024))
    except Exception:
        cap = 64 * 1024 * 1024
    if cap >= 96 * 1024 * 1024:          # v5e / v6e: 128 MiB physical VMEM
        return 100 * 1024 * 1024, 256
    return 56 * 1024 * 1024, 128         # v7x: 64 MiB per TensorCore


# ----------------------------- Pallas kernel -----------------------------

def fused_docre_kernel(h_att_ref, t_att_ref, hs_ref, ts_ref, seqmask_ref,
                       wh1_ref, wt1_ref, w2_ref, bh_ref, bt_ref,
                       doc_attn_ref, s_attn_ref, ho_ref, to_ref):
    # h_att/t_att: [H, RT, C] bf16 ; hs/ts: [RT, Dp] bf16 ; seqmask: [C, Dp+Sp] bf16
    # wh1/wt1: [Dp, Ep] bf16 ; w2: [Dp, 2Ep] bf16 (= [wh2 | wt2]) ; bh/bt: [1, Ep] f32
    # doc_attn: [RT, C] bf16 ; s_attn: [RT, Sp] f32 ; ho/to: [RT, Ep] f32
    H = h_att_ref.shape[0]
    Dp = wh1_ref.shape[0]
    Ep = wh1_ref.shape[1]

    # Per-head f32 accumulation: never materializes the [H, RT, C] product; operands are cast
    # to f32 before the multiply (reference semantics; native VPU path on v5e).
    ht = h_att_ref[0].astype(jnp.float32) * t_att_ref[0].astype(jnp.float32)
    for h in range(1, H):
        ht = ht + h_att_ref[h].astype(jnp.float32) * t_att_ref[h].astype(jnp.float32)

    # sum (not mean) over heads: the /H cancels in the L1 normalization below.
    denom = jnp.sum(ht, axis=1, keepdims=True) + 1e-30              # [RT, 1]
    ht = ht * pl.reciprocal(denom, approx=True)                     # EUP reciprocal
    doc_attn_ref[...] = ht.astype(jnp.bfloat16)

    ht_b = ht.astype(jnp.bfloat16)
    # One MXU pass against the lane-concatenated [seq | sent_mask] RHS.
    rs_sa = jnp.dot(ht_b, seqmask_ref[...], preferred_element_type=jnp.float32)  # [RT, Dp+Sp]
    rs = rs_sa[:, :Dp]
    s_attn_ref[...] = rs_sa[:, Dp:]

    # Extractors: tanh([hs|rs] @ Wh^T + bh), tanh([ts|rs] @ Wt^T + bt) with W pre-split; rs is
    # fed through the MXU once against [wh2 | wt2].
    rs_b = rs.astype(jnp.bfloat16)
    rs_w2 = jnp.dot(rs_b, w2_ref[...], preferred_element_type=jnp.float32)       # [RT, 2Ep]
    h_acc = jnp.dot(hs_ref[...], wh1_ref[...], preferred_element_type=jnp.float32)
    t_acc = jnp.dot(ts_ref[...], wt1_ref[...], preferred_element_type=jnp.float32)
    ho_ref[...] = jnp.tanh(h_acc + rs_w2[:, :Ep] + bh_ref[...])
    to_ref[...] = jnp.tanh(t_acc + rs_w2[:, Ep:] + bt_ref[...])


# ----------------------------- Pallas wrapper -----------------------------

def pallas_fused_forward(h_att, t_att, hs, ts, seqmask, prep, rt, vmem_limit):
    # h_att/t_att: [n, H, Rp, Cp] bf16 ; hs/ts: [n, Rp, Dp] bf16 ; seqmask: [n, Cp, Dp+Sp] bf16
    n, H, Rp, Cp = h_att.shape
    Dp = prep["d_pad"]
    Ep = prep["e_pad"]
    Sp = seqmask.shape[-1] - Dp
    num_rt = Rp // rt

    flops = n * Rp * (2 * H * Cp + 2 * Cp * (Dp + Sp) + 2 * Dp * 2 * Ep + 2 * 2 * Dp * Ep)
    transc = n * Rp * (1 + 2 * Ep)
    bytes_acc = (2 * (h_att.size + t_att.size + hs.size + ts.size + seqmask.size)
                 + 2 * (prep["wh1T"].size + prep["wt1T"].size + prep["w2cat"].size)
                 + 2 * n * Rp * Cp + 4 * n * Rp * (Sp + 2 * Ep))

    return pl.pallas_call(
        fused_docre_kernel,
        out_shape=(jax.ShapeDtypeStruct((n, Rp, Cp), jnp.bfloat16),
                   jax.ShapeDtypeStruct((n, Rp, Sp), jnp.float32),
                   jax.ShapeDtypeStruct((n, Rp, Ep), jnp.float32),
                   jax.ShapeDtypeStruct((n, Rp, Ep), jnp.float32)),
        grid=(n, num_rt),
        in_specs=[
            pl.BlockSpec((None, H, rt, Cp), lambda i, r: (i, 0, r, 0)),
            pl.BlockSpec((None, H, rt, Cp), lambda i, r: (i, 0, r, 0)),
            pl.BlockSpec((None, rt, Dp), lambda i, r: (i, r, 0)),
            pl.BlockSpec((None, rt, Dp), lambda i, r: (i, r, 0)),
            pl.BlockSpec((None, Cp, Dp + Sp), lambda i, r: (i, 0, 0)),   # resident across R
            pl.BlockSpec((Dp, Ep), lambda i, r: (0, 0)),                 # grid-invariant
            pl.BlockSpec((Dp, Ep), lambda i, r: (0, 0)),
            pl.BlockSpec((Dp, 2 * Ep), lambda i, r: (0, 0)),
            pl.BlockSpec((1, Ep), lambda i, r: (0, 0)),
            pl.BlockSpec((1, Ep), lambda i, r: (0, 0)),
        ],
        out_specs=(
            pl.BlockSpec((None, rt, Cp), lambda i, r: (i, r, 0)),
            pl.BlockSpec((None, rt, Sp), lambda i, r: (i, r, 0)),
            pl.BlockSpec((None, rt, Ep), lambda i, r: (i, r, 0)),
            pl.BlockSpec((None, rt, Ep), lambda i, r: (i, r, 0)),
        ),
        compiler_params=pltpu.CompilerParams(
            dimension_semantics=("parallel", "parallel"),
            vmem_limit_bytes=vmem_limit),
        cost_estimate=pl.CostEstimate(flops=int(flops), transcendentals=int(transc),
                                      bytes_accessed=int(bytes_acc)),
    )(h_att, t_att, hs, ts, seqmask,
      prep["wh1T"], prep["wt1T"], prep["w2cat"], prep["bh"], prep["bt"])


# ----------------------------- Param prep (once, outside forward) -----------------------------

def prepare_params(params, hidden_size, emb_size):
    D = hidden_size
    E = emb_size
    Dp = round_up(D, 128)
    Ep = round_up(E, 128)

    def prep_w(w):
        # PyTorch nn.Linear(2D, E) layout: w [E, 2D] -> two lane-dense [Dp, Ep] bf16 halves.
        w1 = jnp.transpose(w[:, :D])
        w2 = jnp.transpose(w[:, D:])
        pad = ((0, Dp - D), (0, Ep - E))
        return (jnp.pad(w1, pad).astype(jnp.bfloat16),
                jnp.pad(w2, pad).astype(jnp.bfloat16))

    wh1, wh2 = prep_w(params["head_W"])
    wt1, wt2 = prep_w(params["tail_W"])
    w2cat = jnp.concatenate([wh2, wt2], axis=1)                    # [Dp, 2Ep] bf16
    bh = jnp.pad(params["head_b"], (0, Ep - E)).reshape(1, Ep).astype(jnp.float32)
    bt = jnp.pad(params["tail_b"], (0, Ep - E)).reshape(1, Ep).astype(jnp.float32)
    return {"wh1T": wh1, "wt1T": wt1, "w2cat": w2cat,
            "bh": bh, "bt": bt, "emb_size": E, "hidden_size": D,
            "d_pad": Dp, "e_pad": Ep}


# ----------------------------- Glue (plain JAX / python metadata) -----------------------------

def pool_entities(seq_i, att_i, entity_pos_i, offset):
    # seq_i: [C, D]; att_i: [H, C, C]. Mention positions are static python data.
    C, D = seq_i.shape
    H = att_i.shape[0]
    embs, atts = [], []
    for e in entity_pos_i:
        if len(e) > 1:
            pos = [s + offset for (s, _end) in e if s + offset < C]
            if pos:
                pidx = jnp.asarray(pos, dtype=jnp.int32)
                e_emb = jax.nn.logsumexp(seq_i[pidx], axis=0)          # [D]
                e_att = jnp.mean(att_i[:, pidx, :], axis=1)            # [H, C]
            else:
                e_emb = jnp.zeros((D,), jnp.float32)
                e_att = jnp.zeros((H, C), jnp.float32)
        else:
            start, _end = e[0]
            if start + offset < C:
                e_emb = seq_i[start + offset]
                e_att = att_i[:, start + offset]
            else:
                e_emb = jnp.zeros((D,), jnp.float32)
                e_att = jnp.zeros((H, C), jnp.float32)
        embs.append(e_emb)
        atts.append(e_att)
    return jnp.stack(embs, axis=0), jnp.stack(atts, axis=0)


def gather_pairs(sequence_output, attention, entity_pos, hts, offset, r_pad, c_pad, d_pad):
    # Produces [n, H, Rp, Cp] pair attention (head axis leading) and padded bf16 hs/ts.
    n, C, D = sequence_output.shape
    H = attention.shape[1]
    hs_l, ts_l, ha_l, ta_l = [], [], [], []
    for i in range(n):
        e_embs, e_atts = pool_entities(sequence_output[i], attention[i], entity_pos[i], offset)
        ht_i = np.asarray(hts[i], dtype=np.int32)
        R = ht_i.shape[0]
        hs_i = jnp.pad(e_embs[ht_i[:, 0]], ((0, r_pad - R), (0, d_pad - D))).astype(jnp.bfloat16)
        ts_i = jnp.pad(e_embs[ht_i[:, 1]], ((0, r_pad - R), (0, d_pad - D))).astype(jnp.bfloat16)
        ha_i = jnp.transpose(e_atts[ht_i[:, 0]], (1, 0, 2))            # [H, R, C]
        ta_i = jnp.transpose(e_atts[ht_i[:, 1]], (1, 0, 2))
        ha_i = jnp.pad(ha_i, ((0, 0), (0, r_pad - R), (0, c_pad - C)))
        ta_i = jnp.pad(ta_i, ((0, 0), (0, r_pad - R), (0, c_pad - C)))
        hs_l.append(hs_i); ts_l.append(ts_i); ha_l.append(ha_i); ta_l.append(ta_i)
    hs = jnp.stack(hs_l, axis=0)                                       # [n, Rp, Dp] bf16
    ts = jnp.stack(ts_l, axis=0)
    h_att = jnp.stack(ha_l, axis=0).astype(jnp.bfloat16)               # [n, H, Rp, Cp]
    t_att = jnp.stack(ta_l, axis=0).astype(jnp.bfloat16)
    return hs, ts, h_att, t_att


def build_sent_mask(sent_pos, n, c_pad, s_pad, offset):
    S = max(len(sp) for sp in sent_pos)
    mask = np.zeros((n, c_pad, s_pad), dtype=np.float32)
    for i, sp in enumerate(sent_pos):
        for j, (s0, s1) in enumerate(sp):
            mask[i, s0 + offset:s1 + offset, j] = 1.0
    return jnp.asarray(mask, dtype=jnp.bfloat16), S


# ----------------------------- Forward (Pallas path) -----------------------------

def docre_forward(prep, sequence_output, attention, attention_mask,
                  entity_pos, hts, sent_pos, offset=1, evi_thresh=0.2, max_sent_num=25,
                  r_tile=None):
    n, C, D = sequence_output.shape
    vmem_limit, rt_default = _device_budget()
    if r_tile is None:
        r_tile = rt_default

    rels = [len(h) for h in hts]
    max_r = max(rels)
    rt = min(r_tile, round_up(max_r, 16))              # 16-multiple: bf16 sublane packing
    if n == 1 and max_r > 16:
        # guarantee >= 2 "parallel" grid steps so both v7x TensorCores stay busy
        rt = min(rt, round_up((max_r + 1) // 2, 16))
    r_pad = round_up(max_r, rt)

    c_pad = round_up(C, 128)
    d_pad = prep["d_pad"]
    e_pad = prep["e_pad"]
    E = prep["emb_size"]
    S = max(len(sp) for sp in sent_pos)
    s_pad = round_up(S, 128)

    # entity pooling + (h,t) gather (static python metadata -> plain JAX glue)
    hs, ts, h_att, t_att = gather_pairs(sequence_output, attention, entity_pos, hts,
                                        offset, r_pad, c_pad, d_pad)
    seq_pad = jnp.pad(sequence_output,
                      ((0, 0), (0, c_pad - C), (0, d_pad - D))).astype(jnp.bfloat16)
    sent_mask, _ = build_sent_mask(sent_pos, n, c_pad, s_pad, offset)
    seqmask = jnp.concatenate([seq_pad, sent_mask], axis=-1)           # [n, Cp, Dp+Sp]

    # fully fused get_hrt + forward_evi + forward_rel_no_graph hot path
    doc_attn_b, s_attn_b, hs_out_b, ts_out_b = pallas_fused_forward(
        h_att, t_att, hs, ts, seqmask, prep, rt, vmem_limit)

    # strip padding (pairs / lanes) and flatten to the torch [total_rels, ...] layout
    def unpad(x, last):
        return jnp.concatenate(
            [x[i, :rels[i], :last].astype(jnp.float32) for i in range(n)], axis=0)

    hs_out = unpad(hs_out_b, E)
    ts_out = unpad(ts_out_b, E)
    doc_attn = unpad(doc_attn_b, C)
    s_attn = unpad(s_attn_b, S)
    evi_pred = jnp.pad(s_attn > evi_thresh, ((0, 0), (0, max_sent_num - S)))

    output = {"doc_attn": doc_attn, "s_attn": s_attn, "evi_pred": evi_pred}
    return (hs_out, ts_out), output, None   # rss_rels=None (relation_cls=None)


# ----------------------------- Pure-JAX reference -----------------------------

def docre_forward_ref(params, sequence_output, attention, attention_mask,
                      entity_pos, hts, sent_pos, offset=1, evi_thresh=0.2, max_sent_num=25):
    n, C, D = sequence_output.shape
    rels = [len(h) for h in hts]
    hs_l, ts_l, rs_l, da_l = [], [], [], []
    for i in range(n):
        e_embs, e_atts = pool_entities(sequence_output[i], attention[i], entity_pos[i], offset)
        ht_i = np.asarray(hts[i], dtype=np.int32)
        hs_l.append(e_embs[ht_i[:, 0]])
        ts_l.append(e_embs[ht_i[:, 1]])
        h_att = e_atts[ht_i[:, 0]]                                     # [R, H, C]
        t_att = e_atts[ht_i[:, 1]]
        ht_att = jnp.mean(h_att * t_att, axis=1)
        ht_att = ht_att / (jnp.sum(ht_att, axis=1, keepdims=True) + 1e-30)
        da_l.append(ht_att)
        rs_l.append(jnp.einsum("ld,rl->rd", sequence_output[i], ht_att))
    hs = jnp.concatenate(hs_l, 0); ts = jnp.concatenate(ts_l, 0)
    rs = jnp.concatenate(rs_l, 0); doc_attn = jnp.concatenate(da_l, 0)

    hs_out = jnp.tanh(jnp.concatenate([hs, rs], -1) @ params["head_W"].T + params["head_b"])
    ts_out = jnp.tanh(jnp.concatenate([ts, rs], -1) @ params["tail_W"].T + params["tail_b"])

    S = max(len(sp) for sp in sent_pos)
    s_attn_l, start = [], 0
    for i in range(n):
        da_i = doc_attn[start:start + rels[i]]
        start += rels[i]
        cols = [jnp.sum(da_i[:, s0 + offset:s1 + offset], axis=-1) for (s0, s1) in sent_pos[i]]
        cols += [jnp.zeros_like(cols[0])] * (S - len(sent_pos[i]))
        s_attn_l.append(jnp.stack(cols, axis=-1))
    s_attn = jnp.concatenate(s_attn_l, 0)
    evi_pred = jnp.pad(s_attn > evi_thresh, ((0, 0), (0, max_sent_num - S)))
    return (hs_out, ts_out), {"doc_attn": doc_attn, "s_attn": s_attn, "evi_pred": evi_pred}, None


# ----------------------------- Main -----------------------------

if __name__ == "__main__":
    key = jax.random.PRNGKey(0)
    n, C, D, H, E = 2, 128, 64, 2, 64     # batch, seq, hidden_size, heads, emb_size
    offset = 1                            # transformer_type == 'bert'

    k_seq, k_att, kw1, kb1, kw2, kb2 = jax.random.split(key, 6)

    # Synthetic encoder outputs (stand-in for process_long_input on self.model).
    sequence_output = 0.5 * jax.random.normal(k_seq, (n, C, D), dtype=jnp.float32)
    attention = jax.nn.softmax(jax.random.normal(k_att, (n, H, C, C), dtype=jnp.float32), axis=-1)
    attention_mask = jnp.ones((n, C), dtype=jnp.float32)

    # Parameters (nn.Linear(hidden*2, emb) layout: W [E, 2D], b [E]).
    params = {
        "head_W": 0.05 * jax.random.normal(kw1, (E, 2 * D), dtype=jnp.float32),
        "head_b": 0.01 * jax.random.normal(kb1, (E,), dtype=jnp.float32),
        "tail_W": 0.05 * jax.random.normal(kw2, (E, 2 * D), dtype=jnp.float32),
        "tail_b": 0.01 * jax.random.normal(kb2, (E,), dtype=jnp.float32),
    }
    prep = prepare_params(params, hidden_size=D, emb_size=E)   # once, outside forward

    # Entity mention spans, head-tail pairs, sentence spans (static python metadata).
    entity_pos = [
        [[(2, 4), (10, 12)], [(20, 22)], [(40, 42), (50, 52), (60, 62)], [(90, 92)]],
        [[(5, 7)], [(15, 17), (25, 27)], [(35, 37)], [(70, 72), (80, 82)]],
    ]
    hts = [[(a, b) for a in range(4) for b in range(4) if a != b] for _ in range(n)]
    sent_pos = [
        [(0, 30), (30, 60), (60, 90), (90, 120)],
        [(0, 40), (40, 80), (80, 120)],
    ]

    logits, output, rss_rels = docre_forward(
        prep, sequence_output, attention, attention_mask, entity_pos, hts, sent_pos, offset)
    logits = jax.tree_util.tree_map(jax.block_until_ready, logits)
    output = jax.tree_util.tree_map(jax.block_until_ready, output)

    logits_ref, output_ref, _ = docre_forward_ref(
        params, sequence_output, attention, attention_mask, entity_pos, hts, sent_pos, offset)

    np.testing.assert_allclose(np.asarray(logits[0]), np.asarray(logits_ref[0]), rtol=2e-2, atol=2e-2)
    np.testing.assert_allclose(np.asarray(logits[1]), np.asarray(logits_ref[1]), rtol=2e-2, atol=2e-2)
    np.testing.assert_allclose(np.asarray(output["doc_attn"]), np.asarray(output_ref["doc_attn"]),
                               rtol=2e-2, atol=3e-3)
    np.testing.assert_allclose(np.asarray(output["s_attn"]), np.asarray(output_ref["s_attn"]),
                               rtol=2e-2, atol=3e-3)

    print("KERNEL_OK")
</pallas_src>

<mosaic_0001>
module attributes {stable_mosaic.version = 11 : i64} {
  func.func @fused_docre_kernel(%arg0: i32, %arg1: i32, %arg2: memref<1x2x16x128xbf16, #tpu.memory_space<vmem>>, %arg3: memref<1x2x16x128xbf16, #tpu.memory_space<vmem>>, %arg4: memref<1x16x128xbf16, #tpu.memory_space<vmem>>, %arg5: memref<1x16x128xbf16, #tpu.memory_space<vmem>>, %arg6: memref<1x128x256xbf16, #tpu.memory_space<vmem>>, %arg7: memref<128x128xbf16, #tpu.memory_space<vmem>>, %arg8: memref<128x128xbf16, #tpu.memory_space<vmem>>, %arg9: memref<128x256xbf16, #tpu.memory_space<vmem>>, %arg10: memref<1x128xf32, #tpu.memory_space<vmem>>, %arg11: memref<1x128xf32, #tpu.memory_space<vmem>>, %arg12: memref<1x16x128xbf16, #tpu.memory_space<vmem>>, %arg13: memref<1x16x128xf32, #tpu.memory_space<vmem>>, %arg14: memref<1x16x128xf32, #tpu.memory_space<vmem>>, %arg15: memref<1x16x128xf32, #tpu.memory_space<vmem>>) attributes {dimension_semantics = [#tpu.dimension_semantics<parallel>, #tpu.dimension_semantics<parallel>], iteration_bounds = array<i64: 2, 1>, scalar_prefetch = 0 : i64, scratch_operands = 0 : i64, tpu.core_type = #tpu.core_type<tc>, window_params = [{transform_indices = @transform_0, window_bounds = array<i64: 1, 2, 16, 128>}, {transform_indices = @transform_1, window_bounds = array<i64: 1, 2, 16, 128>}, {transform_indices = @transform_2, window_bounds = array<i64: 1, 16, 128>}, {transform_indices = @transform_3, window_bounds = array<i64: 1, 16, 128>}, {transform_indices = @transform_4, window_bounds = array<i64: 1, 128, 256>}, {pipeline_mode = #tpu.pipeline_mode<synchronous>, transform_indices = @transform_5, window_bounds = array<i64: 128, 128>}, {pipeline_mode = #tpu.pipeline_mode<synchronous>, transform_indices = @transform_6, window_bounds = array<i64: 128, 128>}, {pipeline_mode = #tpu.pipeline_mode<synchronous>, transform_indices = @transform_7, window_bounds = array<i64: 128, 256>}, {pipeline_mode = #tpu.pipeline_mode<synchronous>, transform_indices = @transform_8, window_bounds = array<i64: 1, 128>}, {pipeline_mode = #tpu.pipeline_mode<synchronous>, transform_indices = @transform_9, window_bounds = array<i64: 1, 128>}, {transform_indices = @transform_10, window_bounds = array<i64: 1, 16, 128>}, {transform_indices = @transform_11, window_bounds = array<i64: 1, 16, 128>}, {transform_indices = @transform_12, window_bounds = array<i64: 1, 16, 128>}, {transform_indices = @transform_13, window_bounds = array<i64: 1, 16, 128>}]} {
    %c0 = arith.constant 0 : index
    %c0_0 = arith.constant 0 : index
    %c0_1 = arith.constant 0 : index
    %c0_2 = arith.constant 0 : index
    %0 = vector.load %arg2[%c0, %c0_0, %c0_1, %c0_2] : memref<1x2x16x128xbf16, #tpu.memory_space<vmem>>, vector<1x1x16x128xbf16>
    %1 = vector.shape_cast %0 : vector<1x1x16x128xbf16> to vector<16x128xbf16>
    %2 = arith.extf %1 : vector<16x128xbf16> to vector<16x128xf32>
    %c0_3 = arith.constant 0 : index
    %c0_4 = arith.constant 0 : index
    %c0_5 = arith.constant 0 : index
    %c0_6 = arith.constant 0 : index
    %3 = vector.load %arg3[%c0_3, %c0_4, %c0_5, %c0_6] : memref<1x2x16x128xbf16, #tpu.memory_space<vmem>>, vector<1x1x16x128xbf16>
    %4 = vector.shape_cast %3 : vector<1x1x16x128xbf16> to vector<16x128xbf16>
    %5 = arith.extf %4 : vector<16x128xbf16> to vector<16x128xf32>
    %6 = arith.mulf %2, %5 : vector<16x128xf32>
    %c0_7 = arith.constant 0 : index
    %c1 = arith.constant 1 : index
    %c0_8 = arith.constant 0 : index
    %c0_9 = arith.constant 0 : index
    %7 = vector.load %arg2[%c0_7, %c1, %c0_8, %c0_9] : memref<1x2x16x128xbf16, #tpu.memory_space<vmem>>, vector<1x1x16x128xbf16>
    %8 = vector.shape_cast %7 : vector<1x1x16x128xbf16> to vector<16x128xbf16>
    %9 = arith.extf %8 : vector<16x128xbf16> to vector<16x128xf32>
    %c0_10 = arith.constant 0 : index
    %c1_11 = arith.constant 1 : index
    %c0_12 = arith.constant 0 : index
    %c0_13 = arith.constant 0 : index
    %10 = vector.load %arg3[%c0_10, %c1_11, %c0_12, %c0_13] : memref<1x2x16x128xbf16, #tpu.memory_space<vmem>>, vector<1x1x16x128xbf16>
    %11 = vector.shape_cast %10 : vector<1x1x16x128xbf16> to vector<16x128xbf16>
    %12 = arith.extf %11 : vector<16x128xbf16> to vector<16x128xf32>
    %13 = arith.mulf %9, %12 : vector<16x128xf32>
    %14 = arith.addf %6, %13 : vector<16x128xf32>
    %cst = arith.constant dense<0.000000e+00> : vector<16xf32>
    %15 = vector.multi_reduction <add>, %14, %cst [1] : vector<16x128xf32> to vector<16xf32>
    %16 = vector.shape_cast %15 : vector<16xf32> to vector<16x1xf32>
    %cst_14 = arith.constant 1.000000e-30 : f32
    %17 = vector.broadcast %cst_14 : f32 to vector<16x1xf32>
    %18 = arith.addf %16, %17 : vector<16x1xf32>
    %19 = tpu.reciprocal %18 {approx = true} : vector<16x1xf32> -> vector<16x1xf32>
    %20 = vector.broadcast %19 : vector<16x1xf32> to vector<16x128xf32>
    %21 = arith.mulf %14, %20 : vector<16x128xf32>
    %22 = arith.truncf %21 : vector<16x128xf32> to vector<16x128xbf16>
    %c0_15 = arith.constant 0 : index
    %c0_16 = arith.constant 0 : index
    %c0_17 = arith.constant 0 : index
    %23 = vector.load %arg12[%c0_15, %c0_16, %c0_17] : memref<1x16x128xbf16, #tpu.memory_space<vmem>>, vector<1x16x128xbf16>
    %24 = vector.shape_cast %23 : vector<1x16x128xbf16> to vector<16x128xbf16>
    %25 = vector.shape_cast %22 : vector<16x128xbf16> to vector<1x16x128xbf16>
    tpu.vector_store %arg12[%c0_15, %c0_16, %c0_17], %25 {strides = array<i32>} : memref<1x16x128xbf16, #tpu.memory_space<vmem>>, vector<1x16x128xbf16>,
    %26 = arith.truncf %21 : vector<16x128xf32> to vector<16x128xbf16>
    %c0_18 = arith.constant 0 : index
    %c0_19 = arith.constant 0 : index
    %c0_20 = arith.constant 0 : index
    %27 = vector.load %arg6[%c0_18, %c0_19, %c0_20] : memref<1x128x256xbf16, #tpu.memory_space<vmem>>, vector<1x128x256xbf16>
    %28 = vector.shape_cast %27 : vector<1x128x256xbf16> to vector<128x256xbf16>
    %cst_21 = arith.constant dense<0.000000e+00> : vector<16x256xf32>
    %29 = tpu.matmul %26, %28, %cst_21 {dimension_numbers = #tpu.dot_dimension_numbers<[1], [0], [0], [1], [0, 0, 1, 1], [], []>} : vector<16x128xbf16>, vector<128x256xbf16>, vector<16x256xf32> -> vector<16x256xf32>
    %30 = vector.extract_strided_slice %29 {offsets = [0, 0], sizes = [16, 128], strides = [1, 1]} : vector<16x256xf32> to vector<16x128xf32>
    %31 = vector.extract_strided_slice %29 {offsets = [0, 128], sizes = [16, 128], strides = [1, 1]} : vector<16x256xf32> to vector<16x128xf32>
    %c0_22 = arith.constant 0 : index
    %c0_23 = arith.constant 0 : index
    %c0_24 = arith.constant 0 : index
    %32 = vector.load %arg13[%c0_22, %c0_23, %c0_24] : memref<1x16x128xf32, #tpu.memory_space<vmem>>, vector<1x16x128xf32>
    %33 = vector.shape_cast %32 : vector<1x16x128xf32> to vector<16x128xf32>
    %34 = vector.shape_cast %31 : vector<16x128xf32> to vector<1x16x128xf32>
    tpu.vector_store %arg13[%c0_22, %c0_23, %c0_24], %34 {strides = array<i32>} : memref<1x16x128xf32, #tpu.memory_space<vmem>>, vector<1x16x128xf32>,
    %35 = arith.truncf %30 : vector<16x128xf32> to vector<16x128xbf16>
    %c0_25 = arith.constant 0 : index
    %c0_26 = arith.constant 0 : index
    %36 = vector.load %arg9[%c0_25, %c0_26] : memref<128x256xbf16, #tpu.memory_space<vmem>>, vector<128x256xbf16>
    %cst_27 = arith.constant dense<0.000000e+00> : vector<16x256xf32>
    %37 = tpu.matmul %35, %36, %cst_27 {dimension_numbers = #tpu.dot_dimension_numbers<[1], [0], [0], [1], [0, 0, 1, 1], [], []>} : vector<16x128xbf16>, vector<128x256xbf16>, vector<16x256xf32> -> vector<16x256xf32>
    %c0_28 = arith.constant 0 : index
    %c0_29 = arith.constant 0 : index
    %c0_30 = arith.constant 0 : index
    %38 = vector.load %arg4[%c0_28, %c0_29, %c0_30] : memref<1x16x128xbf16, #tpu.memory_space<vmem>>, vector<1x16x128xbf16>
    %39 = vector.shape_cast %38 : vector<1x16x128xbf16> to vector<16x128xbf16>
    %c0_31 = arith.constant 0 : index
    %c0_32 = arith.constant 0 : index
    %40 = vector.load %arg7[%c0_31, %c0_32] : memref<128x128xbf16, #tpu.memory_space<vmem>>, vector<128x128xbf16>
    %cst_33 = arith.constant dense<0.000000e+00> : vector<16x128xf32>
    %41 = tpu.matmul %39, %40, %cst_33 {dimension_numbers = #tpu.dot_dimension_numbers<[1], [0], [0], [1], [0, 0, 1, 1], [], []>} : vector<16x128xbf16>, vector<128x128xbf16>, vector<16x128xf32> -> vector<16x128xf32>
    %c0_34 = arith.constant 0 : index
    %c0_35 = arith.constant 0 : index
    %c0_36 = arith.constant 0 : index
    %42 = vector.load %arg5[%c0_34, %c0_35, %c0_36] : memref<1x16x128xbf16, #tpu.memory_space<vmem>>, vector<1x16x128xbf16>
    %43 = vector.shape_cast %42 : vector<1x16x128xbf16> to vector<16x128xbf16>
    %c0_37 = arith.constant 0 : index
    %c0_38 = arith.constant 0 : index
    %44 = vector.load %arg8[%c0_37, %c0_38] : memref<128x128xbf16, #tpu.memory_space<vmem>>, vector<128x128xbf16>
    %cst_39 = arith.constant dense<0.000000e+00> : vector<16x128xf32>
    %45 = tpu.matmul %43, %44, %cst_39 {dimension_numbers = #tpu.dot_dimension_numbers<[1], [0], [0], [1], [0, 0, 1, 1], [], []>} : vector<16x128xbf16>, vector<128x128xbf16>, vector<16x128xf32> -> vector<16x128xf32>
    %46 = vector.extract_strided_slice %37 {offsets = [0, 0], sizes = [16, 128], strides = [1, 1]} : vector<16x256xf32> to vector<16x128xf32>
    %47 = arith.addf %41, %46 : vector<16x128xf32>
    %c0_40 = arith.constant 0 : index
    %c0_41 = arith.constant 0 : index
    %48 = vector.load %arg10[%c0_40, %c0_41] : memref<1x128xf32, #tpu.memory_space<vmem>>, vector<1x128xf32>
    %49 = vector.broadcast %48 : vector<1x128xf32> to vector<16x128xf32>
    %50 = arith.addf %47, %49 : vector<16x128xf32>
    %51 = math.tanh %50 : vector<16x128xf32>
    %c0_42 = arith.constant 0 : index
    %c0_43 = arith.constant 0 : index
    %c0_44 = arith.constant 0 : index
    %52 = vector.load %arg14[%c0_42, %c0_43, %c0_44] : memref<1x16x128xf32, #tpu.memory_space<vmem>>, vector<1x16x128xf32>
    %53 = vector.shape_cast %52 : vector<1x16x128xf32> to vector<16x128xf32>
    %54 = vector.shape_cast %51 : vector<16x128xf32> to vector<1x16x128xf32>
    tpu.vector_store %arg14[%c0_42, %c0_43, %c0_44], %54 {strides = array<i32>} : memref<1x16x128xf32, #tpu.memory_space<vmem>>, vector<1x16x128xf32>,
    %55 = vector.extract_strided_slice %37 {offsets = [0, 128], sizes = [16, 128], strides = [1, 1]} : vector<16x256xf32> to vector<16x128xf32>
    %56 = arith.addf %45, %55 : vector<16x128xf32>
    %c0_45 = arith.constant 0 : index
    %c0_46 = arith.constant 0 : index
    %57 = vector.load %arg11[%c0_45, %c0_46] : memref<1x128xf32, #tpu.memory_space<vmem>>, vector<1x128xf32>
    %58 = vector.broadcast %57 : vector<1x128xf32> to vector<16x128xf32>
    %59 = arith.addf %56, %58 : vector<16x128xf32>
    %60 = math.tanh %59 : vector<16x128xf32>
    %c0_47 = arith.constant 0 : index
    %c0_48 = arith.constant 0 : index
    %c0_49 = arith.constant 0 : index
    %61 = vector.load %arg15[%c0_47, %c0_48, %c0_49] : memref<1x16x128xf32, #tpu.memory_space<vmem>>, vector<1x16x128xf32>
    %62 = vector.shape_cast %61 : vector<1x16x128xf32> to vector<16x128xf32>
    %63 = vector.shape_cast %60 : vector<16x128xf32> to vector<1x16x128xf32>
    tpu.vector_store %arg15[%c0_47, %c0_48, %c0_49], %63 {strides = array<i32>} : memref<1x16x128xf32, #tpu.memory_space<vmem>>, vector<1x16x128xf32>,
    return
  }
  func.func @transform_0(%arg0: i32, %arg1: i32) -> (i32, i32, i32, i32) {
    %c0_i32 = arith.constant 0 : i32
    %c0_i32_0 = arith.constant 0 : i32
    %c0_i32_1 = arith.constant 0 : i32
    return %arg0, %c0_i32, %arg1, %c0_i32_0 : i32, i32, i32, i32
  }
  func.func @transform_1(%arg0: i32, %arg1: i32) -> (i32, i32, i32, i32) {
    %c0_i32 = arith.constant 0 : i32
    %c0_i32_0 = arith.constant 0 : i32
    %c0_i32_1 = arith.constant 0 : i32
    return %arg0, %c0_i32, %arg1, %c0_i32_0 : i32, i32, i32, i32
  }
  func.func @transform_2(%arg0: i32, %arg1: i32) -> (i32, i32, i32) {
    %c0_i32 = arith.constant 0 : i32
    %c0_i32_0 = arith.constant 0 : i32
    return %arg0, %arg1, %c0_i32 : i32, i32, i32
  }
  func.func @transform_3(%arg0: i32, %arg1: i32) -> (i32, i32, i32) {
    %c0_i32 = arith.constant 0 : i32
    %c0_i32_0 = arith.constant 0 : i32
    return %arg0, %arg1, %c0_i32 : i32, i32, i32
  }
  func.func @transform_4(%arg0: i32, %arg1: i32) -> (i32, i32, i32) {
    %c0_i32 = arith.constant 0 : i32
    %c0_i32_0 = arith.constant 0 : i32
    %c0_i32_1 = arith.constant 0 : i32
    return %arg0, %c0_i32, %c0_i32_0 : i32, i32, i32
  }
  func.func @transform_5(%arg0: i32, %arg1: i32) -> (i32, i32) {
    %c0_i32 = arith.constant 0 : i32
    %c0_i32_0 = arith.constant 0 : i32
    %c0_i32_1 = arith.constant 0 : i32
    return %c0_i32, %c0_i32_0 : i32, i32
  }
  func.func @transform_6(%arg0: i32, %arg1: i32) -> (i32, i32) {
    %c0_i32 = arith.constant 0 : i32
    %c0_i32_0 = arith.constant 0 : i32
    %c0_i32_1 = arith.constant 0 : i32
    return %c0_i32, %c0_i32_0 : i32, i32
  }
  func.func @transform_7(%arg0: i32, %arg1: i32) -> (i32, i32) {
    %c0_i32 = arith.constant 0 : i32
    %c0_i32_0 = arith.constant 0 : i32
    %c0_i32_1 = arith.constant 0 : i32
    return %c0_i32, %c0_i32_0 : i32, i32
  }
  func.func @transform_8(%arg0: i32, %arg1: i32) -> (i32, i32) {
    %c0_i32 = arith.constant 0 : i32
    %c0_i32_0 = arith.constant 0 : i32
    %c0_i32_1 = arith.constant 0 : i32
    return %c0_i32, %c0_i32_0 : i32, i32
  }
  func.func @transform_9(%arg0: i32, %arg1: i32) -> (i32, i32) {
    %c0_i32 = arith.constant 0 : i32
    %c0_i32_0 = arith.constant 0 : i32
    %c0_i32_1 = arith.constant 0 : i32
    return %c0_i32, %c0_i32_0 : i32, i32
  }
  func.func @transform_10(%arg0: i32, %arg1: i32) -> (i32, i32, i32) {
    %c0_i32 = arith.constant 0 : i32
    %c0_i32_0 = arith.constant 0 : i32
    return %arg0, %arg1, %c0_i32 : i32, i32, i32
  }
  func.func @transform_11(%arg0: i32, %arg1: i32) -> (i32, i32, i32) {
    %c0_i32 = arith.constant 0 : i32
    %c0_i32_0 = arith.constant 0 : i32
    return %arg0, %arg1, %c0_i32 : i32, i32, i32
  }
  func.func @transform_12(%arg0: i32, %arg1: i32) -> (i32, i32, i32) {
    %c0_i32 = arith.constant 0 : i32
    %c0_i32_0 = arith.constant 0 : i32
    return %arg0, %arg1, %c0_i32 : i32, i32, i32
  }
  func.func @transform_13(%arg0: i32, %arg1: i32) -> (i32, i32, i32) {
    %c0_i32 = arith.constant 0 : i32
    %c0_i32_0 = arith.constant 0 : i32
    return %arg0, %arg1, %c0_i32 : i32, i32, i32
  }
}

</mosaic_0001>

<llo_original>
// kernel: tpu_custom_call.1
$region0: #{tpu_custom_call.1}
  #allocation0 [shape = 'u32[]', space=smem, size = 0x4, offset = 0x4, fixed_abs, tag = 'smem constant byte address 0x4 - core index']
  #allocation1 [shape = 'u32[144,128]{1,0:T(1,128)}', space=vmem, size = 0x12000, scoped, tag = 'internal scratch']
  %s0 = inlined_call_operand.hbm [shape: bf16[2,2,16,128], index: 0, kind: input, shape index: {}]
  %s1 = inlined_call_operand.hbm [shape: bf16[2,2,16,128], index: 1, kind: input, shape index: {}]
  %s2 = inlined_call_operand.hbm [shape: bf16[2,16,128], index: 2, kind: input, shape index: {}]
  %s3 = inlined_call_operand.hbm [shape: bf16[2,16,128], index: 3, kind: input, shape index: {}]
  %s4 = inlined_call_operand.hbm [shape: bf16[2,128,256], index: 4, kind: input, shape index: {}]
  %s5 = inlined_call_operand.hbm [shape: bf16[128,128], index: 5, kind: input, shape index: {}]
  %s6 = inlined_call_operand.hbm [shape: bf16[128,128], index: 6, kind: input, shape index: {}]
  %s7 = inlined_call_operand.hbm [shape: bf16[128,256], index: 7, kind: input, shape index: {}]
  %s8 = inlined_call_operand.vmem [shape: f32[1,128], index: 8, kind: input, shape index: {}]
  %s9 = inlined_call_operand.vmem [shape: f32[1,128], index: 9, kind: input, shape index: {}]
  %s10 = inlined_call_operand.hbm [shape: bf16[2,16,128], index: 10, kind: output, shape index: {0}]
  %s11 = inlined_call_operand.hbm [shape: f32[2,16,128], index: 11, kind: output, shape index: {1}]
  %s12 = inlined_call_operand.hbm [shape: f32[2,16,128], index: 12, kind: output, shape index: {2}]
  %s13 = inlined_call_operand.hbm [shape: f32[2,16,128], index: 13, kind: output, shape index: {3}]
  %14 = xla_tuple %s10, %s11, %s12, %s13
  %s15 = sld [smem:[#allocation0]]
  $region129: #{tpu_custom_call.1} parent=0
    _
  %s17 = ssub.s32 1, %s15
  %s18 = scalar_select 0, %s17, %s15
  $region1: #{tpu_custom_call.1} parent=0
    #allocation2 [shape = 'u8[16384]{0}', space=vmem, size = 0x4000, scoped, tag = 'input window, operand 0']
    #allocation3 [shape = 's32[2]{0}', space=sflag, size = 0x8, scoped, tag = 'scoped memory for tpu_custom_call.1']
    #allocation4 [shape = 's32[2]{0}', space=sflag, size = 0x8, scoped, tag = 'scoped memory for tpu_custom_call.1']
    #allocation5 [shape = 'u8[16384]{0}', space=vmem, size = 0x4000, scoped, tag = 'input window, operand 1']
    #allocation6 [shape = 's32[2]{0}', space=sflag, size = 0x8, scoped, tag = 'scoped memory for tpu_custom_call.1']
    #allocation7 [shape = 'u8[8192]{0}', space=vmem, size = 0x2000, scoped, tag = 'input window, operand 2']
    #allocation8 [shape = 'u8[8192]{0}', space=vmem, size = 0x2000, scoped, tag = 'input window, operand 3']
    #allocation9 [shape = 's32[2]{0}', space=sflag, size = 0x8, scoped, tag = 'scoped memory for tpu_custom_call.1']
    #allocation10 [shape = 'u8[131072]{0}', space=vmem, size = 0x20000, scoped, tag = 'input window, operand 4']
    #allocation11 [shape = 'u8[32768]{0}', space=vmem, size = 0x8000, scoped, tag = 'input window, operand 5, single buffered']
    #allocation12 [shape = 's32[1]{0}', space=sflag, size = 0x4, scoped, tag = 'scoped memory for tpu_custom_call.1']
    #allocation13 [shape = 'u8[32768]{0}', space=vmem, size = 0x8000, scoped, tag = 'input window, operand 6, single buffered']
    #allocation14 [shape = 'u8[65536]{0}', space=vmem, size = 0x10000, scoped, tag = 'input window, operand 7, single buffered']
    #allocation15 [shape = 's32[1]{0}', space=sflag, size = 0x4, scoped, tag = 'scoped memory for tpu_custom_call.1']
    #allocation16 [shape = 'u8[8192]{0}', space=vmem, size = 0x2000, scoped, tag = 'output window, operand 0']
    #allocation17 [shape = 'u8[16384]{0}', space=vmem, size = 0x4000, scoped, tag = 'output window, operand 1']
    #allocation18 [shape = 's32[2]{0}', space=sflag, size = 0x8, scoped, tag = 'scoped memory for tpu_custom_call.1']
    #allocation19 [shape = 'u8[16384]{0}', space=vmem, size = 0x4000, scoped, tag = 'output window, operand 2']
    #allocation20 [shape = 'u8[16384]{0}', space=vmem, size = 0x4000, scoped, tag = 'output window, operand 3']
    #allocation21 [shape = 's32[2]{0}', space=sflag, size = 0x8, scoped, tag = 'scoped memory for tpu_custom_call.1']
    %19 = vsyncpa [#allocation3], 0
    %s20 = scalar_lea.sflag [#allocation3], 1
    %21 = vsyncpa %s20, 0
    %22 = vsyncpa [#allocation6], 0
    %s23 = scalar_lea.sflag [#allocation6], 1
    %24 = vsyncpa %s23, 0
    %25 = vsyncpa [#allocation9], 0
    %s26 = scalar_lea.sflag [#allocation9], 1
    %27 = vsyncpa %s26, 0
    %28 = vsyncpa [#allocation12], 0
    %29 = vsyncpa [#allocation15], 0
    %30 = vsyncpa [#allocation4], 0
    %s31 = scalar_lea.sflag [#allocation4], 1
    %32 = vsyncpa %s31, 0
    %33 = vsyncpa [#allocation18], 0
    %s34 = scalar_lea.sflag [#allocation18], 1
    %35 = vsyncpa %s34, 0
    %36 = vsyncpa [#allocation21], 0
    %s37 = scalar_lea.sflag [#allocation21], 1
    %38 = vsyncpa %s37, 0
    loop: start=0, step=1, limit=4
    $region2: #{tpu_custom_call.1} parent=1 // loop_pre_header
      _
    $region3: #{tpu_custom_call.1} parent=1 // loop_header
      %s40 = sphi 0, %s44
      %p41 = scmp.ge.s32.totalorder %s40, 4
      %s47 = sphi 0, %s59
      %s48 = sphi 0, %s55
      %s49 = sphi 0, %s47
      %s50 = sphi 0, %s48
      %s51 = sphi 0, %s49
      %s52 = sphi 0, %s50
      %s64 = sphi 0, %s66
      %s67 = sphi 0, %s64
      %s68 = sphi 0, %s67
      %s84 = sphi 0, %s68
      %s92 = sphi 0, %s94
      %s95 = sphi 0, %s92
      %s96 = sphi 0, %s95
      %s112 = sphi 0, %s96
      %s120 = sphi 0, %s122
      %s123 = sphi 0, %s120
      %s124 = sphi 0, %s123
      %s140 = sphi 0, %s124
      %s148 = sphi 0, %s150
      %s151 = sphi 0, %s148
      %s152 = sphi 0, %s151
      %s168 = sphi 0, %s152
      %s174 = sphi 0, %s176
      %s177 = sphi 0, %s174
      %s178 = sphi 0, %s177
      %s194 = sphi 0, %s178
      %s198 = sphi 0, %s198
      %s200 = sphi 0, %s198
      %s201 = sphi 0, %s200
      %s215 = sphi 0, %s201
      %s219 = sphi 0, %s219
      %s221 = sphi 0, %s219
      %s222 = sphi 0, %s221
      %s236 = sphi 0, %s222
      %s240 = sphi 0, %s240
      %s242 = sphi 0, %s240
      %s243 = sphi 0, %s242
      %s257 = sphi 0, %s243
      %s261 = sphi 0, %s261
      %s263 = sphi 0, %s261
      %s264 = sphi 0, %s263
      %s278 = sphi 0, %s264
      %s282 = sphi 0, %s282
      %s284 = sphi 0, %s282
      %s285 = sphi 0, %s284
      %s299 = sphi 0, %s285
      %s307 = sphi 0, %s309
      %s310 = sphi 0, %s307
      %s311 = sphi 0, %s310
      %s327 = sphi 0, %s311
      %s335 = sphi 0, %s337
      %s338 = sphi 0, %s335
      %s339 = sphi 0, %s338
      %s355 = sphi 0, %s339
      %s363 = sphi 0, %s365
      %s366 = sphi 0, %s363
      %s367 = sphi 0, %s366
      %s383 = sphi 0, %s367
      %s391 = sphi 0, %s393
      %s394 = sphi 0, %s391
      %s395 = sphi 0, %s394
      %s411 = sphi 0, %s395
    $region4: #{tpu_custom_call.1} parent=1 // loop_header_branch
      %43 = sbr.rel (%p41) target = $region8
    $region5: #{tpu_custom_call.1} parent=1 // loop_body
      %s45 = ssub.s32 %s40, 1
      %s46 = ssub.s32 %s40, 2
      %s53 = sadd.s32 1, %s48
      %p54 = scmp.ge.s32.totalorder %s53, 1
      %s55 = scalar_select %p54, 0, %s53
      %s56 = sadd.s32 1, %s47
      %s57 = scalar_select %p54, %s56, %s47
      %p58 = scmp.ge.s32.totalorder %s57, 2
      %s59 = scalar_select %p58, 0, %s57
      %s60 = ssub.s32 %s47, %s59
      %s61 = ssub.s32 %s48, %s55
      %s62 = sor.u32 %s60, %s61
      %p63 = scmp.eq.s32.totalorder %s62, 0
      %s65 = sadd.s32 %s64, 1
      %s66 = scalar_select %p63, %s64, %s65
      %p69 = pneg %p63
      %p70 = scmp.eq.s32.totalorder %s40, 1
      %p71 = por %p69, %p70
      %p72 = scmp.ne.s32.totalorder %s64, %s67
      %p73 = scmp.eq.s32.totalorder %s40, 0
      %p74 = por %p72, %p73
      %p75 = scmp.ne.s32.totalorder %s64, %s67
      %p76 = scmp.eq.s32.totalorder %s45, 1
      %p77 = por %p75, %p76
      %p78 = scmp.ne.s32.totalorder %s67, %s68
      %p79 = scmp.eq.s32.totalorder %s45, 0
      %p80 = por %p78, %p79
      %p81 = scmp.ne.s32.totalorder %s67, %s68
      %p82 = scmp.eq.s32.totalorder %s46, 1
      %p83 = por %p81, %p82
      %p85 = scmp.ne.s32.totalorder %s68, %s84
      %p86 = scmp.eq.s32.totalorder %s46, 0
      %p87 = por %p85, %p86
      %s88 = ssub.s32 %s47, %s59
      %s89 = ssub.s32 %s48, %s55
      %s90 = sor.u32 %s88, %s89
      %p91 = scmp.eq.s32.totalorder %s90, 0
      %s93 = sadd.s32 %s92, 1
      %s94 = scalar_select %p91, %s92, %s93
      %p97 = pneg %p91
      %p98 = scmp.eq.s32.totalorder %s40, 1
      %p99 = por %p97, %p98
      %p100 = scmp.ne.s32.totalorder %s92, %s95
      %p101 = scmp.eq.s32.totalorder %s40, 0
      %p102 = por %p100, %p101
      %p103 = scmp.ne.s32.totalorder %s92, %s95
      %p104 = scmp.eq.s32.totalorder %s45, 1
      %p105 = por %p103, %p104
      %p106 = scmp.ne.s32.totalorder %s95, %s96
      %p107 = scmp.eq.s32.totalorder %s45, 0
      %p108 = por %p106, %p107
      %p109 = scmp.ne.s32.totalorder %s95, %s96
      %p110 = scmp.eq.s32.totalorder %s46, 1
      %p111 = por %p109, %p110
      %p113 = scmp.ne.s32.totalorder %s96, %s112
      %p114 = scmp.eq.s32.totalorder %s46, 0
      %p115 = por %p113, %p114
      %s116 = ssub.s32 %s47, %s59
      %s117 = ssub.s32 %s48, %s55
      %s118 = sor.u32 %s116, %s117
      %p119 = scmp.eq.s32.totalorder %s118, 0
      %s121 = sadd.s32 %s120, 1
      %s122 = scalar_select %p119, %s120, %s121
      %p125 = pneg %p119
      %p126 = scmp.eq.s32.totalorder %s40, 1
      %p127 = por %p125, %p126
      %p128 = scmp.ne.s32.totalorder %s120, %s123
      %p129 = scmp.eq.s32.totalorder %s40, 0
      %p130 = por %p128, %p129
      %p131 = scmp.ne.s32.totalorder %s120, %s123
      %p132 = scmp.eq.s32.totalorder %s45, 1
      %p133 = por %p131, %p132
      %p134 = scmp.ne.s32.totalorder %s123, %s124
      %p135 = scmp.eq.s32.totalorder %s45, 0
      %p136 = por %p134, %p135
      %p137 = scmp.ne.s32.totalorder %s123, %s124
      %p138 = scmp.eq.s32.totalorder %s46, 1
      %p139 = por %p137, %p138
      %p141 = scmp.ne.s32.totalorder %s124, %s140
      %p142 = scmp.eq.s32.totalorder %s46, 0
      %p143 = por %p141, %p142
      %s144 = ssub.s32 %s47, %s59
      %s145 = ssub.s32 %s48, %s55
      %s146 = sor.u32 %s144, %s145
      %p147 = scmp.eq.s32.totalorder %s146, 0
      %s149 = sadd.s32 %s148, 1
      %s150 = scalar_select %p147, %s148, %s149
      %p153 = pneg %p147
      %p154 = scmp.eq.s32.totalorder %s40, 1
      %p155 = por %p153, %p154
      %p156 = scmp.ne.s32.totalorder %s148, %s151
      %p157 = scmp.eq.s32.totalorder %s40, 0
      %p158 = por %p156, %p157
      %p159 = scmp.ne.s32.totalorder %s148, %s151
      %p160 = scmp.eq.s32.totalorder %s45, 1
      %p161 = por %p159, %p160
      %p162 = scmp.ne.s32.totalorder %s151, %s152
      %p163 = scmp.eq.s32.totalorder %s45, 0
      %p164 = por %p162, %p163
      %p165 = scmp.ne.s32.totalorder %s151, %s152
      %p166 = scmp.eq.s32.totalorder %s46, 1
      %p167 = por %p165, %p166
      %p169 = scmp.ne.s32.totalorder %s152, %s168
      %p170 = scmp.eq.s32.totalorder %s46, 0
      %p171 = por %p169, %p170
      %s172 = ssub.s32 %s47, %s59
      %p173 = scmp.eq.s32.totalorder %s172, 0
      %s175 = sadd.s32 %s174, 1
      %s176 = scalar_select %p173, %s174, %s175
      %p179 = pneg %p173
      %p180 = scmp.eq.s32.totalorder %s40, 1
      %p181 = por %p179, %p180
      %p182 = scmp.ne.s32.totalorder %s174, %s177
      %p183 = scmp.eq.s32.totalorder %s40, 0
      %p184 = por %p182, %p183
      %p185 = scmp.ne.s32.totalorder %s174, %s177
      %p186 = scmp.eq.s32.totalorder %s45, 1
      %p187 = por %p185, %p186
      %p188 = scmp.ne.s32.totalorder %s177, %s178
      %p189 = scmp.eq.s32.totalorder %s45, 0
      %p190 = por %p188, %p189
      %p191 = scmp.ne.s32.totalorder %s177, %s178
      %p192 = scmp.eq.s32.totalorder %s46, 1
      %p193 = por %p191, %p192
      %p195 = scmp.ne.s32.totalorder %s178, %s194
      %p196 = scmp.eq.s32.totalorder %s46, 0
      %p197 = por %p195, %p196
      %s199 = sadd.s32 %s198, 1
      %p202 = scmp.eq.s32.totalorder %s40, 1
      %p203 = scmp.ne.s32.totalorder %s198, %s200
      %p204 = scmp.eq.s32.totalorder %s40, 0
      %p205 = por %p203, %p204
      %p206 = scmp.ne.s32.totalorder %s198, %s200
      %p207 = scmp.eq.s32.totalorder %s45, 1
      %p208 = por %p206, %p207
      %p209 = scmp.ne.s32.totalorder %s200, %s201
      %p210 = scmp.eq.s32.totalorder %s45, 0
      %p211 = por %p209, %p210
      %p212 = scmp.ne.s32.totalorder %s200, %s201
      %p213 = scmp.eq.s32.totalorder %s46, 1
      %p214 = por %p212, %p213
      %p216 = scmp.ne.s32.totalorder %s201, %s215
      %p217 = scmp.eq.s32.totalorder %s46, 0
      %p218 = por %p216, %p217
      %s220 = sadd.s32 %s219, 1
      %p223 = scmp.eq.s32.totalorder %s40, 1
      %p224 = scmp.ne.s32.totalorder %s219, %s221
      %p225 = scmp.eq.s32.totalorder %s40, 0
      %p226 = por %p224, %p225
      %p227 = scmp.ne.s32.totalorder %s219, %s221
      %p228 = scmp.eq.s32.totalorder %s45, 1
      %p229 = por %p227, %p228
      %p230 = scmp.ne.s32.totalorder %s221, %s222
      %p231 = scmp.eq.s32.totalorder %s45, 0
      %p232 = por %p230, %p231
      %p233 = scmp.ne.s32.totalorder %s221, %s222
      %p234 = scmp.eq.s32.totalorder %s46, 1
      %p235 = por %p233, %p234
      %p237 = scmp.ne.s32.totalorder %s222, %s236
      %p238 = scmp.eq.s32.totalorder %s46, 0
      %p239 = por %p237, %p238
      %s241 = sadd.s32 %s240, 1
      %p244 = scmp.eq.s32.totalorder %s40, 1
      %p245 = scmp.ne.s32.totalorder %s240, %s242
      %p246 = scmp.eq.s32.totalorder %s40, 0
      %p247 = por %p245, %p246
      %p248 = scmp.ne.s32.totalorder %s240, %s242
      %p249 = scmp.eq.s32.totalorder %s45, 1
      %p250 = por %p248, %p249
      %p251 = scmp.ne.s32.totalorder %s242, %s243
      %p252 = scmp.eq.s32.totalorder %s45, 0
      %p253 = por %p251, %p252
      %p254 = scmp.ne.s32.totalorder %s242, %s243
      %p255 = scmp.eq.s32.totalorder %s46, 1
      %p256 = por %p254, %p255
      %p258 = scmp.ne.s32.totalorder %s243, %s257
      %p259 = scmp.eq.s32.totalorder %s46, 0
      %p260 = por %p258, %p259
      %s262 = sadd.s32 %s261, 1
      %p265 = scmp.eq.s32.totalorder %s40, 1
      %p266 = scmp.ne.s32.totalorder %s261, %s263
      %p267 = scmp.eq.s32.totalorder %s40, 0
      %p268 = por %p266, %p267
      %p269 = scmp.ne.s32.totalorder %s261, %s263
      %p270 = scmp.eq.s32.totalorder %s45, 1
      %p271 = por %p269, %p270
      %p272 = scmp.ne.s32.totalorder %s263, %s264
      %p273 = scmp.eq.s32.totalorder %s45, 0
      %p274 = por %p272, %p273
      %p275 = scmp.ne.s32.totalorder %s263, %s264
      %p276 = scmp.eq.s32.totalorder %s46, 1
      %p277 = por %p275, %p276
      %p279 = scmp.ne.s32.totalorder %s264, %s278
      %p280 = scmp.eq.s32.totalorder %s46, 0
      %p281 = por %p279, %p280
      %s283 = sadd.s32 %s282, 1
      %p286 = scmp.eq.s32.totalorder %s40, 1
      %p287 = scmp.ne.s32.totalorder %s282, %s284
      %p288 = scmp.eq.s32.totalorder %s40, 0
      %p289 = por %p287, %p288
      %p290 = scmp.ne.s32.totalorder %s282, %s284
      %p291 = scmp.eq.s32.totalorder %s45, 1
      %p292 = por %p290, %p291
      %p293 = scmp.ne.s32.totalorder %s284, %s285
      %p294 = scmp.eq.s32.totalorder %s45, 0
      %p295 = por %p293, %p294
      %p296 = scmp.ne.s32.totalorder %s284, %s285
      %p297 = scmp.eq.s32.totalorder %s46, 1
      %p298 = por %p296, %p297
      %p300 = scmp.ne.s32.totalorder %s285, %s299
      %p301 = scmp.eq.s32.totalorder %s46, 0
      %p302 = por %p300, %p301
      %s303 = ssub.s32 %s47, %s59
      %s304 = ssub.s32 %s48, %s55
      %s305 = sor.u32 %s303, %s304
      %p306 = scmp.eq.s32.totalorder %s305, 0
      %s308 = sadd.s32 %s307, 1
      %s309 = scalar_select %p306, %s307, %s308
      %p312 = pneg %p306
      %p313 = scmp.eq.s32.totalorder %s40, 1
      %p314 = por %p312, %p313
      %p315 = scmp.ne.s32.totalorder %s307, %s310
      %p316 = scmp.eq.s32.totalorder %s40, 0
      %p317 = por %p315, %p316
      %p318 = scmp.ne.s32.totalorder %s307, %s310
      %p319 = scmp.eq.s32.totalorder %s45, 1
      %p320 = por %p318, %p319
      %p321 = scmp.ne.s32.totalorder %s310, %s311
      %p322 = scmp.eq.s32.totalorder %s45, 0
      %p323 = por %p321, %p322
      %p324 = scmp.ne.s32.totalorder %s310, %s311
      %p325 = scmp.eq.s32.totalorder %s46, 1
      %p326 = por %p324, %p325
      %p328 = scmp.ne.s32.totalorder %s311, %s327
      %p329 = scmp.eq.s32.totalorder %s46, 0
      %p330 = por %p328, %p329
      %s331 = ssub.s32 %s47, %s59
      %s332 = ssub.s32 %s48, %s55
      %s333 = sor.u32 %s331, %s332
      %p334 = scmp.eq.s32.totalorder %s333, 0
      %s336 = sadd.s32 %s335, 1
      %s337 = scalar_select %p334, %s335, %s336
      %p340 = pneg %p334
      %p341 = scmp.eq.s32.totalorder %s40, 1
      %p342 = por %p340, %p341
      %p343 = scmp.ne.s32.totalorder %s335, %s338
      %p344 = scmp.eq.s32.totalorder %s40, 0
      %p345 = por %p343, %p344
      %p346 = scmp.ne.s32.totalorder %s335, %s338
      %p347 = scmp.eq.s32.totalorder %s45, 1
      %p348 = por %p346, %p347
      %p349 = scmp.ne.s32.totalorder %s338, %s339
      %p350 = scmp.eq.s32.totalorder %s45, 0
      %p351 = por %p349, %p350
      %p352 = scmp.ne.s32.totalorder %s338, %s339
      %p353 = scmp.eq.s32.totalorder %s46, 1
      %p354 = por %p352, %p353
      %p356 = scmp.ne.s32.totalorder %s339, %s355
      %p357 = scmp.eq.s32.totalorder %s46, 0
      %p358 = por %p356, %p357
      %s359 = ssub.s32 %s47, %s59
      %s360 = ssub.s32 %s48, %s55
      %s361 = sor.u32 %s359, %s360
      %p362 = scmp.eq.s32.totalorder %s361, 0
      %s364 = sadd.s32 %s363, 1
      %s365 = scalar_select %p362, %s363, %s364
      %p368 = pneg %p362
      %p369 = scmp.eq.s32.totalorder %s40, 1
      %p370 = por %p368, %p369
      %p371 = scmp.ne.s32.totalorder %s363, %s366
      %p372 = scmp.eq.s32.totalorder %s40, 0
      %p373 = por %p371, %p372
      %p374 = scmp.ne.s32.totalorder %s363, %s366
      %p375 = scmp.eq.s32.totalorder %s45, 1
      %p376 = por %p374, %p375
      %p377 = scmp.ne.s32.totalorder %s366, %s367
      %p378 = scmp.eq.s32.totalorder %s45, 0
      %p379 = por %p377, %p378
      %p380 = scmp.ne.s32.totalorder %s366, %s367
      %p381 = scmp.eq.s32.totalorder %s46, 1
      %p382 = por %p380, %p381
      %p384 = scmp.ne.s32.totalorder %s367, %s383
      %p385 = scmp.eq.s32.totalorder %s46, 0
      %p386 = por %p384, %p385
      %s387 = ssub.s32 %s47, %s59
      %s388 = ssub.s32 %s48, %s55
      %s389 = sor.u32 %s387, %s388
      %p390 = scmp.eq.s32.totalorder %s389, 0
      %s392 = sadd.s32 %s391, 1
      %s393 = scalar_select %p390, %s391, %s392
      %p396 = pneg %p390
      %p397 = scmp.eq.s32.totalorder %s40, 1
      %p398 = por %p396, %p397
      %p399 = scmp.ne.s32.totalorder %s391, %s394
      %p400 = scmp.eq.s32.totalorder %s40, 0
      %p401 = por %p399, %p400
      %p402 = scmp.ne.s32.totalorder %s391, %s394
      %p403 = scmp.eq.s32.totalorder %s45, 1
      %p404 = por %p402, %p403
      %p405 = scmp.ne.s32.totalorder %s394, %s395
      %p406 = scmp.eq.s32.totalorder %s45, 0
      %p407 = por %p405, %p406
      %p408 = scmp.ne.s32.totalorder %s394, %s395
      %p409 = scmp.eq.s32.totalorder %s46, 1
      %p410 = por %p408, %p409
      %p412 = scmp.ne.s32.totalorder %s395, %s411
      %p413 = scmp.eq.s32.totalorder %s46, 0
      %p414 = por %p412, %p413
      %p415 = scmp.le.s32.totalorder 1, %s40
      %p416 = scmp.lt.s32.totalorder %s40, 3
      %p417 = pnand %p415, %p416
      %p418 = pneg %p417
      // Predicated region
      $region9: #{tpu_custom_call.1} parent=5 // pred_check
        _
      $region10: #{tpu_custom_call.1} parent=5 // pred_check_branch
        %420 = sbr.rel (%p417) target = $region12
      $region11: #{tpu_custom_call.1} parent=5 // pred_region
        %s421 = ssub.s32 %s40, 1
        // Predicated region
        $region13: #{tpu_custom_call.1} parent=11 // pred_check
          %p422 = pneg %p211
        $region14: #{tpu_custom_call.1} parent=11 // pred_check_branch
          %424 = sbr.rel (%p422) target = $region16
        $region15: #{tpu_custom_call.1} parent=11 // pred_region
          %s426 = ssub.s32 1024, 1024
          %427 = vsyncadd [#allocation12], %s426
          %s428 = sshll.u32 [#allocation11], 4
          %s429 = int_to_ptr.vmem [resolvable:$true] %s428
          %434 = dma.hbm_to_vmem [thread:$0]  %s5, 1024, %s429, [#allocation12], 64, 64, 4
        $region16: #{tpu_custom_call.1} parent=11 // pred_fallthru
          _
        // Predicated region
        $region17: #{tpu_custom_call.1} parent=11 // pred_check
          %p435 = pneg %p232
        $region18: #{tpu_custom_call.1} parent=11 // pred_check_branch
          %437 = sbr.rel (%p435) target = $region20
        $region19: #{tpu_custom_call.1} parent=11 // pred_region
          %s439 = ssub.s32 1024, 1024
          %440 = vsyncadd [#allocation12], %s439
          %s441 = sshll.u32 [#allocation13], 4
          %s442 = int_to_ptr.vmem [resolvable:$true] %s441
          %447 = dma.hbm_to_vmem [thread:$0]  %s6, 1024, %s442, [#allocation12], 64, 64, 4
        $region20: #{tpu_custom_call.1} parent=11 // pred_fallthru
          _
        // Predicated region
        $region21: #{tpu_custom_call.1} parent=11 // pred_check
          %p448 = pneg %p253
        $region22: #{tpu_custom_call.1} parent=11 // pred_check_branch
          %450 = sbr.rel (%p448) target = $region24
        $region23: #{tpu_custom_call.1} parent=11 // pred_region
          %s452 = ssub.s32 2048, 2048
          %453 = vsyncadd [#allocation15], %s452
          %s454 = sshll.u32 [#allocation14], 4
          %s455 = int_to_ptr.vmem [resolvable:$true] %s454
          %460 = dma.hbm_to_vmem [thread:$0]  %s7, 2048, %s455, [#allocation15], 128, 128, 8
        $region24: #{tpu_custom_call.1} parent=11 // pred_fallthru
          _
        // Predicated region
        $region25: #{tpu_custom_call.1} parent=11 // pred_check
          %p461 = pneg %p274
        $region26: #{tpu_custom_call.1} parent=11 // pred_check_branch
          %463 = sbr.rel (%p461) target = $region28
        $region27: #{tpu_custom_call.1} parent=11 // pred_region
          _
        $region28: #{tpu_custom_call.1} parent=11 // pred_fallthru
          _
        // Predicated region
        $region29: #{tpu_custom_call.1} parent=11 // pred_check
          %p464 = pneg %p295
        $region30: #{tpu_custom_call.1} parent=11 // pred_check_branch
          %466 = sbr.rel (%p464) target = $region32
        $region31: #{tpu_custom_call.1} parent=11 // pred_region
          _
        $region32: #{tpu_custom_call.1} parent=11 // pred_fallthru
          _
      $region12: #{tpu_custom_call.1} parent=5 // pred_fallthru
        _
      %p467 = scmp.lt.s32.totalorder %s40, 2
      // Predicated region
      $region33: #{tpu_custom_call.1} parent=5 // pred_check
        %p468 = pneg %p467
      $region34: #{tpu_custom_call.1} parent=5 // pred_check_branch
        %470 = sbr.rel (%p468) target = $region36
      $region35: #{tpu_custom_call.1} parent=5 // pred_region
        // Predicated region
        $region37: #{tpu_custom_call.1} parent=35 // pred_check
          %p471 = pneg %p74
        $region38: #{tpu_custom_call.1} parent=35 // pred_check_branch
          %473 = sbr.rel (%p471) target = $region40
        $region39: #{tpu_custom_call.1} parent=35 // pred_region
          %s474 = sand.u32 %s64, 1
          %s475 = scalar_lea.sflag [#allocation3], %s474
          %s476 = sand.u32 %s64, 1
          %s477 = smul.addr %s476, 16
          %s478 = scalar_lea.vmem [#allocation2], %s477
          %s479 = smul.u32 2, %s48
          %s481 = ssub.s32 256, 256
          %482 = vsyncadd %s475, %s481
          %s483 = smul.addr %s47, 4
          %s484 = sadd.s32 %s479, %s483
          %s485 = smul.addr %s484, 64
          %s486 = scalar_lea.hbm %s0, %s485
          %s487 = sshll.u32 %s478, 4
          %s488 = int_to_ptr.vmem [resolvable:$true] %s487
          %493 = dma.hbm_to_vmem [thread:$0]  %s486, 256, %s488, %s475, 64, 64, 4
        $region40: #{tpu_custom_call.1} parent=35 // pred_fallthru
          _
        // Predicated region
        $region41: #{tpu_custom_call.1} parent=35 // pred_check
          %p494 = pneg %p102
        $region42: #{tpu_custom_call.1} parent=35 // pred_check_branch
          %496 = sbr.rel (%p494) target = $region44
        $region43: #{tpu_custom_call.1} parent=35 // pred_region
          %s497 = sand.u32 %s40, 1
          %s498 = scalar_lea.sflag [#allocation6], %s497
          %s499 = sand.u32 %s92, 1
          %s500 = smul.addr %s499, 16
          %s501 = scalar_lea.vmem [#allocation5], %s500
          %s502 = smul.u32 2, %s48
          %s504 = ssub.s32 256, 256
          %505 = vsyncadd %s498, %s504
          %s506 = smul.addr %s47, 4
          %s507 = sadd.s32 %s502, %s506
          %s508 = smul.addr %s507, 64
          %s509 = scalar_lea.hbm %s1, %s508
          %s510 = sshll.u32 %s501, 4
          %s511 = int_to_ptr.vmem [resolvable:$true] %s510
          %516 = dma.hbm_to_vmem [thread:$0]  %s509, 256, %s511, %s498, 64, 64, 4
        $region44: #{tpu_custom_call.1} parent=35 // pred_fallthru
          _
        // Predicated region
        $region45: #{tpu_custom_call.1} parent=35 // pred_check
          %p517 = pneg %p130
        $region46: #{tpu_custom_call.1} parent=35 // pred_check_branch
          %519 = sbr.rel (%p517) target = $region48
        $region47: #{tpu_custom_call.1} parent=35 // pred_region
          %s520 = sand.u32 %s40, 1
          %s521 = scalar_lea.sflag [#allocation6], %s520
          %s522 = sand.u32 %s120, 1
          %s523 = smul.addr %s522, 8
          %s524 = scalar_lea.vmem [#allocation7], %s523
          %s525 = smul.u32 2, %s48
          %s527 = ssub.s32 128, 128
          %528 = vsyncadd %s521, %s527
          %s529 = smul.addr %s47, 2
          %s530 = sadd.s32 %s525, %s529
          %s531 = smul.addr %s530, 64
          %s532 = scalar_lea.hbm %s2, %s531
          %s533 = sshll.u32 %s524, 4
          %s534 = int_to_ptr.vmem [resolvable:$true] %s533
          %539 = dma.hbm_to_vmem [thread:$0]  %s532, 128, %s534, %s521, 64, 64, 4
        $region48: #{tpu_custom_call.1} parent=35 // pred_fallthru
          _
        // Predicated region
        $region49: #{tpu_custom_call.1} parent=35 // pred_check
          %p540 = pneg %p158
        $region50: #{tpu_custom_call.1} parent=35 // pred_check_branch
          %542 = sbr.rel (%p540) target = $region52
        $region51: #{tpu_custom_call.1} parent=35 // pred_region
          %s543 = sand.u32 %s40, 1
          %s544 = scalar_lea.sflag [#allocation9], %s543
          %s545 = sand.u32 %s148, 1
          %s546 = smul.addr %s545, 8
          %s547 = scalar_lea.vmem [#allocation8], %s546
          %s548 = smul.u32 2, %s48
          %s550 = ssub.s32 128, 128
          %551 = vsyncadd %s544, %s550
          %s552 = smul.addr %s47, 2
          %s553 = sadd.s32 %s548, %s552
          %s554 = smul.addr %s553, 64
          %s555 = scalar_lea.hbm %s3, %s554
          %s556 = sshll.u32 %s547, 4
          %s557 = int_to_ptr.vmem [resolvable:$true] %s556
          %562 = dma.hbm_to_vmem [thread:$0]  %s555, 128, %s557, %s544, 64, 64, 4
        $region52: #{tpu_custom_call.1} parent=35 // pred_fallthru
          _
        // Predicated region
        $region53: #{tpu_custom_call.1} parent=35 // pred_check
          %p563 = pneg %p184
        $region54: #{tpu_custom_call.1} parent=35 // pred_check_branch
          %565 = sbr.rel (%p563) target = $region56
        $region55: #{tpu_custom_call.1} parent=35 // pred_region
          %s566 = sand.u32 %s40, 1
          %s567 = scalar_lea.sflag [#allocation9], %s566
          %s568 = sand.u32 %s174, 1
          %s569 = smul.addr %s568, 128
          %s570 = scalar_lea.vmem [#allocation10], %s569
          %s572 = ssub.s32 2048, 2048
          %573 = vsyncadd %s567, %s572
          %s574 = smul.addr %s47, 32
          %s575 = smul.addr %s574, 64
          %s576 = scalar_lea.hbm %s4, %s575
          %s577 = sshll.u32 %s570, 4
          %s578 = int_to_ptr.vmem [resolvable:$true] %s577
          %583 = dma.hbm_to_vmem [thread:$0]  %s576, 2048, %s578, %s567, 128, 128, 8
        $region56: #{tpu_custom_call.1} parent=35 // pred_fallthru
          _
      $region36: #{tpu_custom_call.1} parent=5 // pred_fallthru
        _
      %p584 = scmp.le.s32.totalorder 1, %s40
      %p585 = scmp.lt.s32.totalorder %s40, 3
      %p586 = pnand %p584, %p585
      %p587 = pneg %p586
      // Predicated region
      $region57: #{tpu_custom_call.1} parent=5 // pred_check
        _
      $region58: #{tpu_custom_call.1} parent=5 // pred_check_branch
        %589 = sbr.rel (%p586) target = $region60
      $region59: #{tpu_custom_call.1} parent=5 // pred_region
        %s590 = ssub.s32 %s40, 1
        %s591 = sand.u32 %s67, 1
        %s592 = scalar_lea.sflag [#allocation3], %s591
        %s593 = sand.u32 %s67, 1
        %s594 = smul.addr %s593, 16
        %s595 = scalar_lea.vmem [#allocation2], %s594
        // Predicated region
        $region61: #{tpu_custom_call.1} parent=59 // pred_check
          %p596 = pneg %p80
        $region62: #{tpu_custom_call.1} parent=59 // pred_check_branch
          %598 = sbr.rel (%p596) target = $region64
        $region63: #{tpu_custom_call.1} parent=59 // pred_region
          %599 = dma.done %s592, 256
        $region64: #{tpu_custom_call.1} parent=59 // pred_fallthru
          _
        %s600 = sand.u32 %s45, 1
        %s601 = scalar_lea.sflag [#allocation6], %s600
        %s602 = sand.u32 %s95, 1
        %s603 = smul.addr %s602, 16
        %s604 = scalar_lea.vmem [#allocation5], %s603
        // Predicated region
        $region65: #{tpu_custom_call.1} parent=59 // pred_check
          %p605 = pneg %p108
        $region66: #{tpu_custom_call.1} parent=59 // pred_check_branch
          %607 = sbr.rel (%p605) target = $region68
        $region67: #{tpu_custom_call.1} parent=59 // pred_region
          %608 = dma.done %s601, 256
        $region68: #{tpu_custom_call.1} parent=59 // pred_fallthru
          _
        %s609 = sand.u32 %s45, 1
        %s610 = scalar_lea.sflag [#allocation6], %s609
        %s611 = sand.u32 %s123, 1
        %s612 = smul.addr %s611, 8
        %s613 = scalar_lea.vmem [#allocation7], %s612
        // Predicated region
        $region69: #{tpu_custom_call.1} parent=59 // pred_check
          %p614 = pneg %p136
        $region70: #{tpu_custom_call.1} parent=59 // pred_check_branch
          %616 = sbr.rel (%p614) target = $region72
        $region71: #{tpu_custom_call.1} parent=59 // pred_region
          %617 = dma.done %s610, 128
        $region72: #{tpu_custom_call.1} parent=59 // pred_fallthru
          _
        %s618 = sand.u32 %s45, 1
        %s619 = scalar_lea.sflag [#allocation9], %s618
        %s620 = sand.u32 %s151, 1
        %s621 = smul.addr %s620, 8
        %s622 = scalar_lea.vmem [#allocation8], %s621
        // Predicated region
        $region73: #{tpu_custom_call.1} parent=59 // pred_check
          %p623 = pneg %p164
        $region74: #{tpu_custom_call.1} parent=59 // pred_check_branch
          %625 = sbr.rel (%p623) target = $region76
        $region75: #{tpu_custom_call.1} parent=59 // pred_region
          %626 = dma.done %s619, 128
        $region76: #{tpu_custom_call.1} parent=59 // pred_fallthru
          _
        %s627 = sand.u32 %s45, 1
        %s628 = scalar_lea.sflag [#allocation9], %s627
        %s629 = sand.u32 %s177, 1
        %s630 = smul.addr %s629, 128
        %s631 = scalar_lea.vmem [#allocation10], %s630
        // Predicated region
        $region77: #{tpu_custom_call.1} parent=59 // pred_check
          %p632 = pneg %p190
        $region78: #{tpu_custom_call.1} parent=59 // pred_check_branch
          %634 = sbr.rel (%p632) target = $region80
        $region79: #{tpu_custom_call.1} parent=59 // pred_region
          %635 = dma.done %s628, 2048
        $region80: #{tpu_custom_call.1} parent=59 // pred_fallthru
          _
        // Predicated region
        $region81: #{tpu_custom_call.1} parent=59 // pred_check
          %p636 = pneg %p211
        $region82: #{tpu_custom_call.1} parent=59 // pred_check_branch
          %638 = sbr.rel (%p636) target = $region84
        $region83: #{tpu_custom_call.1} parent=59 // pred_region
          %639 = dma.done [#allocation12], 1024
        $region84: #{tpu_custom_call.1} parent=59 // pred_fallthru
          _
        // Predicated region
        $region85: #{tpu_custom_call.1} parent=59 // pred_check
          %p640 = pneg %p232
        $region86: #{tpu_custom_call.1} parent=59 // pred_check_branch
          %642 = sbr.rel (%p640) target = $region88
        $region87: #{tpu_custom_call.1} parent=59 // pred_region
          %643 = dma.done [#allocation12], 1024
        $region88: #{tpu_custom_call.1} parent=59 // pred_fallthru
          _
        // Predicated region
        $region89: #{tpu_custom_call.1} parent=59 // pred_check
          %p644 = pneg %p253
        $region90: #{tpu_custom_call.1} parent=59 // pred_check_branch
          %646 = sbr.rel (%p644) target = $region92
        $region91: #{tpu_custom_call.1} parent=59 // pred_region
          %647 = dma.done [#allocation15], 2048
        $region92: #{tpu_custom_call.1} parent=59 // pred_fallthru
          _
        %s648 = sand.u32 %s67, 1
        %s649 = scalar_lea.sflag [#allocation3], %s648
        %s650 = sand.u32 %s67, 1
        %s651 = smul.addr %s650, 16
        %s652 = scalar_lea.vmem [#allocation2], %s651
        %p653 = pneg %p80
        %p654 = pneg %p77
        %s655 = sand.u32 %s45, 1
        %s656 = scalar_lea.sflag [#allocation6], %s655
        %s657 = sand.u32 %s95, 1
        %s658 = smul.addr %s657, 16
        %s659 = scalar_lea.vmem [#allocation5], %s658
        %p660 = pneg %p108
        %p661 = pneg %p105
        %s662 = sand.u32 %s45, 1
        %s663 = scalar_lea.sflag [#allocation6], %s662
        %s664 = sand.u32 %s123, 1
        %s665 = smul.addr %s664, 8
        %s666 = scalar_lea.vmem [#allocation7], %s665
        %p667 = pneg %p136
        %p668 = pneg %p133
        %s669 = sand.u32 %s45, 1
        %s670 = scalar_lea.sflag [#allocation9], %s669
        %s671 = sand.u32 %s151, 1
        %s672 = smul.addr %s671, 8
        %s673 = scalar_lea.vmem [#allocation8], %s672
        %p674 = pneg %p164
        %p675 = pneg %p161
        %s676 = sand.u32 %s45, 1
        %s677 = scalar_lea.sflag [#allocation9], %s676
        %s678 = sand.u32 %s177, 1
        %s679 = smul.addr %s678, 128
        %s680 = scalar_lea.vmem [#allocation10], %s679
        %p681 = pneg %p190
        %p682 = pneg %p187
        %p683 = pneg %p211
        %p684 = pneg %p208
        %p685 = pneg %p232
        %p686 = pneg %p229
        %p687 = pneg %p253
        %p688 = pneg %p250
        %p689 = pneg %p274
        %p690 = pneg %p271
        %p691 = pneg %p295
        %p692 = pneg %p292
        %p693 = pneg %p323
        %p694 = pneg %p320
        %s695 = sand.u32 %s310, 1
        %s696 = scalar_lea.sflag [#allocation4], %s695
        %s697 = sand.u32 %s310, 1
        %s698 = smul.addr %s697, 8
        %s699 = scalar_lea.vmem [#allocation16], %s698
        %p700 = pneg %p351
        %p701 = pneg %p348
        %s702 = sand.u32 %s45, 1
        %s703 = scalar_lea.sflag [#allocation18], %s702
        %s704 = sand.u32 %s338, 1
        %s705 = smul.addr %s704, 16
        %s706 = scalar_lea.vmem [#allocation17], %s705
        %p707 = pneg %p379
        %p708 = pneg %p376
        %s709 = sand.u32 %s45, 1
        %s710 = scalar_lea.sflag [#allocation18], %s709
        %s711 = sand.u32 %s366, 1
        %s712 = smul.addr %s711, 16
        %s713 = scalar_lea.vmem [#allocation19], %s712
        %p714 = pneg %p407
        %p715 = pneg %p404
        %s716 = sand.u32 %s394, 1
        %s717 = scalar_lea.sflag [#allocation21], %s716
        %s718 = sand.u32 %s394, 1
        %s719 = smul.addr %s718, 16
        %s720 = scalar_lea.vmem [#allocation20], %s719
        %s721 = smul.u32 2, %s50
        %s722 = smul.u32 2, %s50
        %s723 = smul.u32 2, %s50
        %s724 = smul.u32 2, %s50
        %s725 = smul.u32 2, %s50
        %s726 = smul.u32 2, %s50
        %s727 = smul.u32 2, %s50
        %s728 = smul.u32 2, %s50
        %v730 = vld [vmem:[%s595] sm:$0xf]
        %v731 = vld [vmem:[%s595 + $0x4] sm:$0xf]
        %v732 = vunpack.c.l.bf16 %v730
        %v733 = vunpack.c.l.bf16 %v731
        %v734 = vld [vmem:[%s604] sm:$0xf]
        %v735 = vld [vmem:[%s604 + $0x4] sm:$0xf]
        %v736 = vunpack.c.l.bf16 %v734
        %v737 = vunpack.c.l.bf16 %v735
        %v738 = vmul.f32 %v732, %v736
        %v739 = vmul.f32 %v733, %v737
        %s740 = scalar_lea.vmem %s595, 8 [#allocation2]
        %v741 = vld [vmem:[%s740] sm:$0xf]
        %v742 = vld [vmem:[%s740 + $0x4] sm:$0xf]
        %v743 = vunpack.c.l.bf16 %v741
        %v744 = vunpack.c.l.bf16 %v742
        %s745 = scalar_lea.vmem %s604, 8 [#allocation5]
        %v746 = vld [vmem:[%s745] sm:$0xf]
        %v747 = vld [vmem:[%s745 + $0x4] sm:$0xf]
        %v748 = vunpack.c.l.bf16 %v746
        %v749 = vunpack.c.l.bf16 %v747
        %v750 = vmul.f32 %v743, %v748
        %v751 = vmul.f32 %v744, %v749
        %v752 = vadd.f32 %v738, %v750
        %v753 = vadd.f32 %v739, %v751
        %754 = vadd.xlane.f32.xlu0 %v752
        %v755 = vpop.xlane.xlu0 %754
        %756 = vadd.xlane.f32.xlu0 %v753
        %v757 = vpop.xlane.xlu0 %756
        %v758 = vadd.f32 %v755, 1e-30
        %v759 = vadd.f32 %v757, 1e-30
        %v760 = vrcp.pop %v758
        %v761 = vrcp.pop %v759
        %v762 = vmul.f32 %v752, %v760
        %v763 = vmul.f32 %v753, %v761
        %v764 = vpack.c.bf16 %v763, %v762
        %v766 = vunpack.c.l.b16 %v764
        %v767 = vunpack.c.h.b16 %v764
        %v768 = vpack.c.b16 %v766, %v766
        %v769 = vpack.c.b16 %v767, %v767
        %772 = vst [vmem:[%s699] sm:$0xf] %v768
        %773 = vst [vmem:[%s699 + $0x4] sm:$0xf] %v769
        %v774 = vld [vmem:[%s631] sm:$0xff]
        %v775 = vld [vmem:[%s631 + $0x8] sm:$0xff]
        %v776 = vld [vmem:[%s631 + $0x10] sm:$0xff]
        %v777 = vld [vmem:[%s631 + $0x18] sm:$0xff]
        %v778 = vld [vmem:[%s631 + $0x20] sm:$0xff]
        %v779 = vld [vmem:[%s631 + $0x28] sm:$0xff]
        %v780 = vld [vmem:[%s631 + $0x30] sm:$0xff]
        %v781 = vld [vmem:[%s631 + $0x38] sm:$0xff]
        %v782 = vld [vmem:[%s631 + $0x40] sm:$0xff]
        %v783 = vld [vmem:[%s631 + $0x48] sm:$0xff]
        %v784 = vld [vmem:[%s631 + $0x50] sm:$0xff]
        %v785 = vld [vmem:[%s631 + $0x58] sm:$0xff]
        %v786 = vld [vmem:[%s631 + $0x60] sm:$0xff]
        %v787 = vld [vmem:[%s631 + $0x68] sm:$0xff]
        %v788 = vld [vmem:[%s631 + $0x70] sm:$0xff]
        %v789 = vld [vmem:[%s631 + $0x78] sm:$0xff]
        %v806 = vunpack.c.l.b16 %v774
        %v807 = vunpack.c.h.b16 %v774
        %v808 = vunpack.c.l.b16 %v775
        %v809 = vunpack.c.h.b16 %v775
        %v810 = vunpack.c.l.b16 %v776
        %v811 = vunpack.c.h.b16 %v776
        %v812 = vunpack.c.l.b16 %v777
        %v813 = vunpack.c.h.b16 %v777
        %v814 = vunpack.c.l.b16 %v778
        %v815 = vunpack.c.h.b16 %v778
        %v816 = vunpack.c.l.b16 %v779
        %v817 = vunpack.c.h.b16 %v779
        %v818 = vunpack.c.l.b16 %v780
        %v819 = vunpack.c.h.b16 %v780
        %v820 = vunpack.c.l.b16 %v781
        %v821 = vunpack.c.h.b16 %v781
        %v822 = vunpack.c.l.b16 %v782
        %v823 = vunpack.c.h.b16 %v782
        %v824 = vunpack.c.l.b16 %v783
        %v825 = vunpack.c.h.b16 %v783
        %v826 = vunpack.c.l.b16 %v784
        %v827 = vunpack.c.h.b16 %v784
        %v828 = vunpack.c.l.b16 %v785
        %v829 = vunpack.c.h.b16 %v785
        %v830 = vunpack.c.l.b16 %v786
        %v831 = vunpack.c.h.b16 %v786
        %v832 = vunpack.c.l.b16 %v787
        %v833 = vunpack.c.h.b16 %v787
        %v834 = vunpack.c.l.b16 %v788
        %v835 = vunpack.c.h.b16 %v788
        %v836 = vunpack.c.l.b16 %v789
        %v837 = vunpack.c.h.b16 %v789
        %v838 = vpack.c.b16 %v808, %v806
        %v839 = vpack.c.b16 %v809, %v807
        %v840 = vpack.c.b16 %v812, %v810
        %v841 = vpack.c.b16 %v813, %v811
        %v842 = vpack.c.b16 %v816, %v814
        %v843 = vpack.c.b16 %v817, %v815
        %v844 = vpack.c.b16 %v820, %v818
        %v845 = vpack.c.b16 %v821, %v819
        %v846 = vpack.c.b16 %v824, %v822
        %v847 = vpack.c.b16 %v825, %v823
        %v848 = vpack.c.b16 %v828, %v826
        %v849 = vpack.c.b16 %v829, %v827
        %v850 = vpack.c.b16 %v832, %v830
        %v851 = vpack.c.b16 %v833, %v831
        %v852 = vpack.c.b16 %v836, %v834
        %v853 = vpack.c.b16 %v837, %v835
        %870 = vmatprep.subr.bf16.mxu0 %v853
        %871 = vmatpush1.bf16.msra.mxu0 %v852
        %872 = vmatprep.subr.bf16.mxu0 %v851
        %873 = vmatpush1.bf16.msra.mxu0 %v850
        %874 = vmatprep.subr.bf16.mxu0 %v849
        %875 = vmatpush1.bf16.msra.mxu0 %v848
        %876 = vmatprep.subr.bf16.mxu0 %v847
        %877 = vmatpush1.bf16.msra.mxu0 %v846
        %878 = vmatprep.subr.bf16.mxu0 %v845
        %879 = vmatpush1.bf16.msra.mxu0 %v844
        %880 = vmatprep.subr.bf16.mxu0 %v843
        %881 = vmatpush1.bf16.msra.mxu0 %v842
        %882 = vmatprep.subr.bf16.mxu0 %v841
        %883 = vmatpush1.bf16.msra.mxu0 %v840
        %884 = vmatprep.subr.bf16.mxu0 %v839
        %885 = vmatpush1.bf16.msra.mxu0 %v838
        %886 = vmatprep.subr.bf16.mxu0 0
        %887 = vmatpush2.bf16.msra.mxu0 0
        %888 = vmatprep.subr.bf16.mxu0 0
        %889 = vmatpush2.bf16.msra.mxu0 0
        %890 = vmatprep.subr.bf16.mxu0 0
        %891 = vmatpush2.bf16.msra.mxu0 0
        %892 = vmatprep.subr.bf16.mxu0 0
        %893 = vmatpush2.bf16.msra.mxu0 0
        %894 = vmatprep.subr.bf16.mxu0 0
        %895 = vmatpush2.bf16.msra.mxu0 0
        %896 = vmatprep.subr.bf16.mxu0 0
        %897 = vmatpush2.bf16.msra.mxu0 0
        %898 = vmatprep.subr.bf16.mxu0 0
        %899 = vmatpush2.bf16.msra.mxu0 0
        %900 = vmatprep.subr.bf16.mxu0 0
        %901 = vmatpush2.bf16.msra.mxu0 0
        %902 = vmatprep.mubr.bf16.mxu0 0
        %903 = vmatmul.mubr.bf16.gmra.mxu0 %v764
        %v904 = vpop.f32.mrf.mxu0
        %v905 = vadd.f32 0.0, %v904
        %v906 = vpop.f32.mrf.mxu0
        %v907 = vadd.f32 0.0, %v906
        %v908 = vpop.f32.mrf.mxu0
        %v909 = vadd.f32 0.0, %v908
        %v910 = vpop.f32.mrf.mxu0
        %v911 = vadd.f32 0.0, %v910
        %912 = vdwg.mxu0
        %913 = vst [vmem:[%s706] sm:$0xff] %v907
        %914 = vst [vmem:[%s706 + $0x8] sm:$0xff] %v911
        %v915 = vpack.c.bf16 %v909, %v905
        %v916 = vld [vmem:[#allocation14] sm:$0xff]
        %v917 = vld [vmem:[#allocation14 + $0x8] sm:$0xff]
        %v918 = vld [vmem:[#allocation14 + $0x10] sm:$0xff]
        %v919 = vld [vmem:[#allocation14 + $0x18] sm:$0xff]
        %v920 = vld [vmem:[#allocation14 + $0x20] sm:$0xff]
        %v921 = vld [vmem:[#allocation14 + $0x28] sm:$0xff]
        %v922 = vld [vmem:[#allocation14 + $0x30] sm:$0xff]
        %v923 = vld [vmem:[#allocation14 + $0x38] sm:$0xff]
        %v924 = vld [vmem:[#allocation14 + $0x40] sm:$0xff]
        %v925 = vld [vmem:[#allocation14 + $0x48] sm:$0xff]
        %v926 = vld [vmem:[#allocation14 + $0x50] sm:$0xff]
        %v927 = vld [vmem:[#allocation14 + $0x58] sm:$0xff]
        %v928 = vld [vmem:[#allocation14 + $0x60] sm:$0xff]
        %v929 = vld [vmem:[#allocation14 + $0x68] sm:$0xff]
        %v930 = vld [vmem:[#allocation14 + $0x70] sm:$0xff]
        %v931 = vld [vmem:[#allocation14 + $0x78] sm:$0xff]
        %v948 = vunpack.c.l.b16 %v916
        %v949 = vunpack.c.h.b16 %v916
        %v950 = vunpack.c.l.b16 %v917
        %v951 = vunpack.c.h.b16 %v917
        %v952 = vunpack.c.l.b16 %v918
        %v953 = vunpack.c.h.b16 %v918
        %v954 = vunpack.c.l.b16 %v919
        %v955 = vunpack.c.h.b16 %v919
        %v956 = vunpack.c.l.b16 %v920
        %v957 = vunpack.c.h.b16 %v920
        %v958 = vunpack.c.l.b16 %v921
        %v959 = vunpack.c.h.b16 %v921
        %v960 = vunpack.c.l.b16 %v922
        %v961 = vunpack.c.h.b16 %v922
        %v962 = vunpack.c.l.b16 %v923
        %v963 = vunpack.c.h.b16 %v923
        %v964 = vunpack.c.l.b16 %v924
        %v965 = vunpack.c.h.b16 %v924
        %v966 = vunpack.c.l.b16 %v925
        %v967 = vunpack.c.h.b16 %v925
        %v968 = vunpack.c.l.b16 %v926
        %v969 = vunpack.c.h.b16 %v926
        %v970 = vunpack.c.l.b16 %v927
        %v971 = vunpack.c.h.b16 %v927
        %v972 = vunpack.c.l.b16 %v928
        %v973 = vunpack.c.h.b16 %v928
        %v974 = vunpack.c.l.b16 %v929
        %v975 = vunpack.c.h.b16 %v929
        %v976 = vunpack.c.l.b16 %v930
        %v977 = vunpack.c.h.b16 %v930
        %v978 = vunpack.c.l.b16 %v931
        %v979 = vunpack.c.h.b16 %v931
        %v980 = vpack.c.b16 %v950, %v948
        %v981 = vpack.c.b16 %v951, %v949
        %v982 = vpack.c.b16 %v954, %v952
        %v983 = vpack.c.b16 %v955, %v953
        %v984 = vpack.c.b16 %v958, %v956
        %v985 = vpack.c.b16 %v959, %v957
        %v986 = vpack.c.b16 %v962, %v960
        %v987 = vpack.c.b16 %v963, %v961
        %v988 = vpack.c.b16 %v966, %v964
        %v989 = vpack.c.b16 %v967, %v965
        %v990 = vpack.c.b16 %v970, %v968
        %v991 = vpack.c.b16 %v971, %v969
        %v992 = vpack.c.b16 %v974, %v972
        %v993 = vpack.c.b16 %v975, %v973
        %v994 = vpack.c.b16 %v978, %v976
        %v995 = vpack.c.b16 %v979, %v977
        %1012 = vmatprep.subr.bf16.mxu0 %v995
        %1013 = vmatpush1.bf16.msra.mxu0 %v994
        %1014 = vmatprep.subr.bf16.mxu0 %v993
        %1015 = vmatpush1.bf16.msra.mxu0 %v992
        %1016 = vmatprep.subr.bf16.mxu0 %v991
        %1017 = vmatpush1.bf16.msra.mxu0 %v990
        %1018 = vmatprep.subr.bf16.mxu0 %v989
        %1019 = vmatpush1.bf16.msra.mxu0 %v988
        %1020 = vmatprep.subr.bf16.mxu0 %v987
        %1021 = vmatpush1.bf16.msra.mxu0 %v986
        %1022 = vmatprep.subr.bf16.mxu0 %v985
        %1023 = vmatpush1.bf16.msra.mxu0 %v984
        %1024 = vmatprep.subr.bf16.mxu0 %v983
        %1025 = vmatpush1.bf16.msra.mxu0 %v982
        %1026 = vmatprep.subr.bf16.mxu0 %v981
        %1027 = vmatpush1.bf16.msra.mxu0 %v980
        %1028 = vmatprep.subr.bf16.mxu0 0
        %1029 = vmatpush2.bf16.msra.mxu0 0
        %1030 = vmatprep.subr.bf16.mxu0 0
        %1031 = vmatpush2.bf16.msra.mxu0 0
        %1032 = vmatprep.subr.bf16.mxu0 0
        %1033 = vmatpush2.bf16.msra.mxu0 0
        %1034 = vmatprep.subr.bf16.mxu0 0
        %1035 = vmatpush2.bf16.msra.mxu0 0
        %1036 = vmatprep.subr.bf16.mxu0 0
        %1037 = vmatpush2.bf16.msra.mxu0 0
        %1038 = vmatprep.subr.bf16.mxu0 0
        %1039 = vmatpush2.bf16.msra.mxu0 0
        %1040 = vmatprep.subr.bf16.mxu0 0
        %1041 = vmatpush2.bf16.msra.mxu0 0
        %1042 = vmatprep.subr.bf16.mxu0 0
        %1043 = vmatpush2.bf16.msra.mxu0 0
        %1044 = vmatprep.mubr.bf16.mxu0 0
        %1045 = vmatmul.mubr.bf16.gmra.mxu0 %v915
        %v1046 = vpop.f32.mrf.mxu0
        %v1047 = vadd.f32 0.0, %v1046
        %v1048 = vpop.f32.mrf.mxu0
        %v1049 = vadd.f32 0.0, %v1048
        %v1050 = vpop.f32.mrf.mxu0
        %v1051 = vadd.f32 0.0, %v1050
        %v1052 = vpop.f32.mrf.mxu0
        %v1053 = vadd.f32 0.0, %v1052
        %1054 = vdwg.mxu0
        %v1055 = vld [vmem:[%s613] sm:$0xf]
        %v1056 = vld [vmem:[%s613 + $0x4] sm:$0xf]
        %v1057 = vld [vmem:[#allocation11] sm:$0xf]
        %v1058 = vld [vmem:[#allocation11 + $0x4] sm:$0xf]
        %v1059 = vld [vmem:[#allocation11 + $0x8] sm:$0xf]
        %v1060 = vld [vmem:[#allocation11 + $0xc] sm:$0xf]
        %v1061 = vld [vmem:[#allocation11 + $0x10] sm:$0xf]
        %v1062 = vld [vmem:[#allocation11 + $0x14] sm:$0xf]
        %v1063 = vld [vmem:[#allocation11 + $0x18] sm:$0xf]
        %v1064 = vld [vmem:[#allocation11 + $0x1c] sm:$0xf]
        %v1065 = vld [vmem:[#allocation11 + $0x20] sm:$0xf]
        %v1066 = vld [vmem:[#allocation11 + $0x24] sm:$0xf]
        %v1067 = vld [vmem:[#allocation11 + $0x28] sm:$0xf]
        %v1068 = vld [vmem:[#allocation11 + $0x2c] sm:$0xf]
        %v1069 = vld [vmem:[#allocation11 + $0x30] sm:$0xf]
        %v1070 = vld [vmem:[#allocation11 + $0x34] sm:$0xf]
        %v1071 = vld [vmem:[#allocation11 + $0x38] sm:$0xf]
        %v1072 = vld [vmem:[#allocation11 + $0x3c] sm:$0xf]
        %v1073 = vld [vmem:[%s622] sm:$0xf]
        %v1074 = vld [vmem:[%s622 + $0x4] sm:$0xf]
        %v1075 = vld [vmem:[#allocation13] sm:$0xf]
        %v1076 = vld [vmem:[#allocation13 + $0x4] sm:$0xf]
        %v1077 = vld [vmem:[#allocation13 + $0x8] sm:$0xf]
        %v1078 = vld [vmem:[#allocation13 + $0xc] sm:$0xf]
        %v1079 = vld [vmem:[#allocation13 + $0x10] sm:$0xf]
        %v1080 = vld [vmem:[#allocation13 + $0x14] sm:$0xf]
        %v1081 = vld [vmem:[#allocation13 + $0x18] sm:$0xf]
        %v1082 = vld [vmem:[#allocation13 + $0x1c] sm:$0xf]
        %v1083 = vld [vmem:[#allocation13 + $0x20] sm:$0xf]
        %v1084 = vld [vmem:[#allocation13 + $0x24] sm:$0xf]
        %v1085 = vld [vmem:[#allocation13 + $0x28] sm:$0xf]
        %v1086 = vld [vmem:[#allocation13 + $0x2c] sm:$0xf]
        %v1087 = vld [vmem:[#allocation13 + $0x30] sm:$0xf]
        %v1088 = vld [vmem:[#allocation13 + $0x34] sm:$0xf]
        %v1089 = vld [vmem:[#allocation13 + $0x38] sm:$0xf]
        %v1090 = vld [vmem:[#allocation13 + $0x3c] sm:$0xf]
        %v1093 = vunpack.c.l.b16 %v1055
        %v1094 = vunpack.c.l.b16 %v1056
        %v1095 = vpack.c.b16 %v1094, %v1093
        %v1113 = vunpack.c.l.b16 %v1057
        %v1114 = vunpack.c.l.b16 %v1058
        %v1115 = vunpack.c.l.b16 %v1059
        %v1116 = vunpack.c.l.b16 %v1060
        %v1117 = vunpack.c.l.b16 %v1061
        %v1118 = vunpack.c.l.b16 %v1062
        %v1119 = vunpack.c.l.b16 %v1063
        %v1120 = vunpack.c.l.b16 %v1064
        %v1121 = vunpack.c.l.b16 %v1065
        %v1122 = vunpack.c.l.b16 %v1066
        %v1123 = vunpack.c.l.b16 %v1067
        %v1124 = vunpack.c.l.b16 %v1068
        %v1125 = vunpack.c.l.b16 %v1069
        %v1126 = vunpack.c.l.b16 %v1070
        %v1127 = vunpack.c.l.b16 %v1071
        %v1128 = vunpack.c.l.b16 %v1072
        %v1129 = vpack.c.b16 %v1114, %v1113
        %v1130 = vpack.c.b16 %v1116, %v1115
        %v1131 = vpack.c.b16 %v1118, %v1117
        %v1132 = vpack.c.b16 %v1120, %v1119
        %v1133 = vpack.c.b16 %v1122, %v1121
        %v1134 = vpack.c.b16 %v1124, %v1123
        %v1135 = vpack.c.b16 %v1126, %v1125
        %v1136 = vpack.c.b16 %v1128, %v1127
        %1145 = vmatprep.subr.bf16.mxu0 0
        %1146 = vmatpush1.bf16.msra.mxu0 %v1136
        %1147 = vmatprep.subr.bf16.mxu0 0
        %1148 = vmatpush1.bf16.msra.mxu0 %v1135
        %1149 = vmatprep.subr.bf16.mxu0 0
        %1150 = vmatpush1.bf16.msra.mxu0 %v1134
        %1151 = vmatprep.subr.bf16.mxu0 0
        %1152 = vmatpush1.bf16.msra.mxu0 %v1133
        %1153 = vmatprep.subr.bf16.mxu0 0
        %1154 = vmatpush1.bf16.msra.mxu0 %v1132
        %1155 = vmatprep.subr.bf16.mxu0 0
        %1156 = vmatpush1.bf16.msra.mxu0 %v1131
        %1157 = vmatprep.subr.bf16.mxu0 0
        %1158 = vmatpush1.bf16.msra.mxu0 %v1130
        %1159 = vmatprep.subr.bf16.mxu0 0
        %1160 = vmatpush1.bf16.msra.mxu0 %v1129
        %1161 = vmatprep.subr.bf16.mxu0 0
        %1162 = vmatpush2.bf16.msra.mxu0 0
        %1163 = vmatprep.subr.bf16.mxu0 0
        %1164 = vmatpush2.bf16.msra.mxu0 0
        %1165 = vmatprep.subr.bf16.mxu0 0
        %1166 = vmatpush2.bf16.msra.mxu0 0
        %1167 = vmatprep.subr.bf16.mxu0 0
        %1168 = vmatpush2.bf16.msra.mxu0 0
        %1169 = vmatprep.subr.bf16.mxu0 0
        %1170 = vmatpush2.bf16.msra.mxu0 0
        %1171 = vmatprep.subr.bf16.mxu0 0
        %1172 = vmatpush2.bf16.msra.mxu0 0
        %1173 = vmatprep.subr.bf16.mxu0 0
        %1174 = vmatpush2.bf16.msra.mxu0 0
        %1175 = vmatprep.subr.bf16.mxu0 0
        %1176 = vmatpush2.bf16.msra.mxu0 0
        %1177 = vmatprep.mubr.bf16.mxu0 0
        %1178 = vmatmul.mubr.bf16.gmra.mxu0 %v1095
        %v1179 = vpop.f32.mrf.mxu0
        %v1180 = vadd.f32 %v1047, %v1179
        %v1181 = vpop.f32.mrf.mxu0
        %v1182 = vpop.f32.mrf.mxu0
        %v1183 = vadd.f32 %v1051, %v1182
        %v1184 = vpop.f32.mrf.mxu0
        %1185 = vdwg.mxu0
        %v1186 = vld [vmem:[%s8] sm:$0x1]
        %v1188 = vlaneseq
        %v1189 = vshrl.u32 %v1188, 7
        %v1190 = vsub.s32 0, %v1189
        %v1191 = vrot.slane %v1186, %v1190
        %v1193 = vadd.f32 %v1180, %v1191
        %v1194 = vadd.f32 %v1183, %v1191
        %v1195 = vtanh.pop %v1193
        %v1196 = vtanh.pop %v1194
        %1197 = vst [vmem:[%s713] sm:$0xff] %v1195
        %1198 = vst [vmem:[%s713 + $0x8] sm:$0xff] %v1196
        %v1201 = vunpack.c.l.b16 %v1073
        %v1202 = vunpack.c.l.b16 %v1074
        %v1203 = vpack.c.b16 %v1202, %v1201
        %v1221 = vunpack.c.l.b16 %v1075
        %v1222 = vunpack.c.l.b16 %v1076
        %v1223 = vunpack.c.l.b16 %v1077
        %v1224 = vunpack.c.l.b16 %v1078
        %v1225 = vunpack.c.l.b16 %v1079
        %v1226 = vunpack.c.l.b16 %v1080
        %v1227 = vunpack.c.l.b16 %v1081
        %v1228 = vunpack.c.l.b16 %v1082
        %v1229 = vunpack.c.l.b16 %v1083
        %v1230 = vunpack.c.l.b16 %v1084
        %v1231 = vunpack.c.l.b16 %v1085
        %v1232 = vunpack.c.l.b16 %v1086
        %v1233 = vunpack.c.l.b16 %v1087
        %v1234 = vunpack.c.l.b16 %v1088
        %v1235 = vunpack.c.l.b16 %v1089
        %v1236 = vunpack.c.l.b16 %v1090
        %v1237 = vpack.c.b16 %v1222, %v1221
        %v1238 = vpack.c.b16 %v1224, %v1223
        %v1239 = vpack.c.b16 %v1226, %v1225
        %v1240 = vpack.c.b16 %v1228, %v1227
        %v1241 = vpack.c.b16 %v1230, %v1229
        %v1242 = vpack.c.b16 %v1232, %v1231
        %v1243 = vpack.c.b16 %v1234, %v1233
        %v1244 = vpack.c.b16 %v1236, %v1235
        %1253 = vmatprep.subr.bf16.mxu0 0
        %1254 = vmatpush1.bf16.msra.mxu0 %v1244
        %1255 = vmatprep.subr.bf16.mxu0 0
        %1256 = vmatpush1.bf16.msra.mxu0 %v1243
        %1257 = vmatprep.subr.bf16.mxu0 0
        %1258 = vmatpush1.bf16.msra.mxu0 %v1242
        %1259 = vmatprep.subr.bf16.mxu0 0
        %1260 = vmatpush1.bf16.msra.mxu0 %v1241
        %1261 = vmatprep.subr.bf16.mxu0 0
        %1262 = vmatpush1.bf16.msra.mxu0 %v1240
        %1263 = vmatprep.subr.bf16.mxu0 0
        %1264 = vmatpush1.bf16.msra.mxu0 %v1239
        %1265 = vmatprep.subr.bf16.mxu0 0
        %1266 = vmatpush1.bf16.msra.mxu0 %v1238
        %1267 = vmatprep.subr.bf16.mxu0 0
        %1268 = vmatpush1.bf16.msra.mxu0 %v1237
        %1269 = vmatprep.subr.bf16.mxu0 0
        %1270 = vmatpush2.bf16.msra.mxu0 0
        %1271 = vmatprep.subr.bf16.mxu0 0
        %1272 = vmatpush2.bf16.msra.mxu0 0
        %1273 = vmatprep.subr.bf16.mxu0 0
        %1274 = vmatpush2.bf16.msra.mxu0 0
        %1275 = vmatprep.subr.bf16.mxu0 0
        %1276 = vmatpush2.bf16.msra.mxu0 0
        %1277 = vmatprep.subr.bf16.mxu0 0
        %1278 = vmatpush2.bf16.msra.mxu0 0
        %1279 = vmatprep.subr.bf16.mxu0 0
        %1280 = vmatpush2.bf16.msra.mxu0 0
        %1281 = vmatprep.subr.bf16.mxu0 0
        %1282 = vmatpush2.bf16.msra.mxu0 0
        %1283 = vmatprep.subr.bf16.mxu0 0
        %1284 = vmatpush2.bf16.msra.mxu0 0
        %1285 = vmatprep.mubr.bf16.mxu0 0
        %1286 = vmatmul.mubr.bf16.gmra.mxu0 %v1203
        %v1287 = vpop.f32.mrf.mxu0
        %v1288 = vadd.f32 %v1049, %v1287
        %v1289 = vpop.f32.mrf.mxu0
        %v1290 = vpop.f32.mrf.mxu0
        %v1291 = vadd.f32 %v1053, %v1290
        %v1292 = vpop.f32.mrf.mxu0
        %1293 = vdwg.mxu0
        %v1294 = vld [vmem:[%s9] sm:$0x1]
        %v1296 = vlaneseq
        %v1297 = vshrl.u32 %v1296, 7
        %v1298 = vsub.s32 0, %v1297
        %v1299 = vrot.slane %v1294, %v1298
        %v1301 = vadd.f32 %v1288, %v1299
        %v1302 = vadd.f32 %v1291, %v1299
        %v1303 = vtanh.pop %v1301
        %v1304 = vtanh.pop %v1302
        %1305 = vst [vmem:[%s720] sm:$0xff] %v1303
        %1306 = vst [vmem:[%s720 + $0x8] sm:$0xff] %v1304
        %s1307 = sand.u32 %s310, 1
        %s1308 = scalar_lea.sflag [#allocation4], %s1307
        %s1309 = sand.u32 %s310, 1
        %s1310 = smul.addr %s1309, 8
        %s1311 = scalar_lea.vmem [#allocation16], %s1310
        %s1312 = sand.u32 %s45, 1
        %s1313 = scalar_lea.sflag [#allocation18], %s1312
        %s1314 = sand.u32 %s338, 1
        %s1315 = smul.addr %s1314, 16
        %s1316 = scalar_lea.vmem [#allocation17], %s1315
        %s1317 = sand.u32 %s45, 1
        %s1318 = scalar_lea.sflag [#allocation18], %s1317
        %s1319 = sand.u32 %s366, 1
        %s1320 = smul.addr %s1319, 16
        %s1321 = scalar_lea.vmem [#allocation19], %s1320
        %s1322 = sand.u32 %s394, 1
        %s1323 = scalar_lea.sflag [#allocation21], %s1322
        %s1324 = sand.u32 %s394, 1
        %s1325 = smul.addr %s1324, 16
        %s1326 = scalar_lea.vmem [#allocation20], %s1325
        // Predicated region
        $region93: #{tpu_custom_call.1} parent=59 // pred_check
          %p1327 = pneg %p320
        $region94: #{tpu_custom_call.1} parent=59 // pred_check_branch
          %1329 = sbr.rel (%p1327) target = $region96
        $region95: #{tpu_custom_call.1} parent=59 // pred_region
          %s1330 = smul.u32 2, %s50
          %s1332 = ssub.s32 128, 128
          %1333 = vsyncadd %s1308, %s1332
          %s1334 = smul.addr %s49, 2
          %s1335 = sadd.s32 %s1330, %s1334
          %s1336 = smul.addr %s1335, 64
          %s1337 = scalar_lea.hbm %s10, %s1336
          %s1338 = sshll.u32 %s1311, 4
          %s1339 = int_to_ptr.vmem [resolvable:$true] %s1338
          %1344 = dma.vmem_to_hbm [thread:$0]  %s1339, 128, %s1337, %s1308, 64, 64, 4
        $region96: #{tpu_custom_call.1} parent=59 // pred_fallthru
          _
        // Predicated region
        $region97: #{tpu_custom_call.1} parent=59 // pred_check
          %p1345 = pneg %p348
        $region98: #{tpu_custom_call.1} parent=59 // pred_check_branch
          %1347 = sbr.rel (%p1345) target = $region100
        $region99: #{tpu_custom_call.1} parent=59 // pred_region
          %s1348 = smul.u32 2, %s50
          %s1350 = ssub.s32 256, 256
          %1351 = vsyncadd %s1313, %s1350
          %s1352 = smul.addr %s49, 2
          %s1353 = sadd.s32 %s1348, %s1352
          %s1354 = smul.addr %s1353, 128
          %s1355 = scalar_lea.hbm %s11, %s1354
          %s1356 = sshll.u32 %s1316, 4
          %s1357 = int_to_ptr.vmem [resolvable:$true] %s1356
          %1362 = dma.vmem_to_hbm [thread:$0]  %s1357, 256, %s1355, %s1313, 128, 128, 8
        $region100: #{tpu_custom_call.1} parent=59 // pred_fallthru
          _
        // Predicated region
        $region101: #{tpu_custom_call.1} parent=59 // pred_check
          %p1363 = pneg %p376
        $region102: #{tpu_custom_call.1} parent=59 // pred_check_branch
          %1365 = sbr.rel (%p1363) target = $region104
        $region103: #{tpu_custom_call.1} parent=59 // pred_region
          %s1366 = smul.u32 2, %s50
          %s1368 = ssub.s32 256, 256
          %1369 = vsyncadd %s1318, %s1368
          %s1370 = smul.addr %s49, 2
          %s1371 = sadd.s32 %s1366, %s1370
          %s1372 = smul.addr %s1371, 128
          %s1373 = scalar_lea.hbm %s12, %s1372
          %s1374 = sshll.u32 %s1321, 4
          %s1375 = int_to_ptr.vmem [resolvable:$true] %s1374
          %1380 = dma.vmem_to_hbm [thread:$0]  %s1375, 256, %s1373, %s1318, 128, 128, 8
        $region104: #{tpu_custom_call.1} parent=59 // pred_fallthru
          _
        // Predicated region
        $region105: #{tpu_custom_call.1} parent=59 // pred_check
          %p1381 = pneg %p404
        $region106: #{tpu_custom_call.1} parent=59 // pred_check_branch
          %1383 = sbr.rel (%p1381) target = $region108
        $region107: #{tpu_custom_call.1} parent=59 // pred_region
          %s1384 = smul.u32 2, %s50
          %s1386 = ssub.s32 256, 256
          %1387 = vsyncadd %s1323, %s1386
          %s1388 = smul.addr %s49, 2
          %s1389 = sadd.s32 %s1384, %s1388
          %s1390 = smul.addr %s1389, 128
          %s1391 = scalar_lea.hbm %s13, %s1390
          %s1392 = sshll.u32 %s1326, 4
          %s1393 = int_to_ptr.vmem [resolvable:$true] %s1392
          %1398 = dma.vmem_to_hbm [thread:$0]  %s1393, 256, %s1391, %s1323, 128, 128, 8
        $region108: #{tpu_custom_call.1} parent=59 // pred_fallthru
          _
      $region60: #{tpu_custom_call.1} parent=5 // pred_fallthru
        _
      %p1399 = scmp.le.s32.totalorder 2, %s40
      // Predicated region
      $region109: #{tpu_custom_call.1} parent=5 // pred_check
        %p1400 = pneg %p1399
      $region110: #{tpu_custom_call.1} parent=5 // pred_check_branch
        %1402 = sbr.rel (%p1400) target = $region112
      $region111: #{tpu_custom_call.1} parent=5 // pred_region
        %s1403 = ssub.s32 %s40, 2
        // Predicated region
        $region113: #{tpu_custom_call.1} parent=111 // pred_check
          %p1404 = pneg %p326
        $region114: #{tpu_custom_call.1} parent=111 // pred_check_branch
          %1406 = sbr.rel (%p1404) target = $region116
        $region115: #{tpu_custom_call.1} parent=111 // pred_region
          %s1407 = sand.u32 %s311, 1
          %s1408 = scalar_lea.sflag [#allocation4], %s1407
          %s1409 = sand.u32 %s311, 1
          %s1410 = smul.addr %s1409, 8
          %s1411 = scalar_lea.vmem [#allocation16], %s1410
          %1412 = dma.done %s1408, 128
        $region116: #{tpu_custom_call.1} parent=111 // pred_fallthru
          _
        // Predicated region
        $region117: #{tpu_custom_call.1} parent=111 // pred_check
          %p1413 = pneg %p354
        $region118: #{tpu_custom_call.1} parent=111 // pred_check_branch
          %1415 = sbr.rel (%p1413) target = $region120
        $region119: #{tpu_custom_call.1} parent=111 // pred_region
          %s1416 = sand.u32 %s46, 1
          %s1417 = scalar_lea.sflag [#allocation18], %s1416
          %s1418 = sand.u32 %s339, 1
          %s1419 = smul.addr %s1418, 16
          %s1420 = scalar_lea.vmem [#allocation17], %s1419
          %1421 = dma.done %s1417, 256
        $region120: #{tpu_custom_call.1} parent=111 // pred_fallthru
          _
        // Predicated region
        $region121: #{tpu_custom_call.1} parent=111 // pred_check
          %p1422 = pneg %p382
        $region122: #{tpu_custom_call.1} parent=111 // pred_check_branch
          %1424 = sbr.rel (%p1422) target = $region124
        $region123: #{tpu_custom_call.1} parent=111 // pred_region
          %s1425 = sand.u32 %s46, 1
          %s1426 = scalar_lea.sflag [#allocation18], %s1425
          %s1427 = sand.u32 %s367, 1
          %s1428 = smul.addr %s1427, 16
          %s1429 = scalar_lea.vmem [#allocation19], %s1428
          %1430 = dma.done %s1426, 256
        $region124: #{tpu_custom_call.1} parent=111 // pred_fallthru
          _
        // Predicated region
        $region125: #{tpu_custom_call.1} parent=111 // pred_check
          %p1431 = pneg %p410
        $region126: #{tpu_custom_call.1} parent=111 // pred_check_branch
          %1433 = sbr.rel (%p1431) target = $region128
        $region127: #{tpu_custom_call.1} parent=111 // pred_region
          %s1434 = sand.u32 %s395, 1
          %s1435 = scalar_lea.sflag [#allocation21], %s1434
          %s1436 = sand.u32 %s395, 1
          %s1437 = smul.addr %s1436, 16
          %s1438 = scalar_lea.vmem [#allocation20], %s1437
          %1439 = dma.done %s1435, 256
        $region128: #{tpu_custom_call.1} parent=111 // pred_fallthru
          _
      $region112: #{tpu_custom_call.1} parent=5 // pred_fallthru
        _
    $region6: #{tpu_custom_call.1} parent=1 // loop_footer
      %s44 = sadd.s32 1, %s40
    $region7: #{tpu_custom_call.1} parent=1 // loop_footer_branch
      %39 = sbr.rel target = $region3
    $region8: #{tpu_custom_call.1} parent=1 // loop_exit
      _
    %1440 = vsyncpa [#allocation3], 1
    %s1441 = scalar_lea.sflag [#allocation3], 1
    %1442 = vsyncpa %s1441, 1
    %1443 = vsyncpa [#allocation6], 1
    %s1444 = scalar_lea.sflag [#allocation6], 1
    %1445 = vsyncpa %s1444, 1
    %1446 = vsyncpa [#allocation9], 1
    %s1447 = scalar_lea.sflag [#allocation9], 1
    %1448 = vsyncpa %s1447, 1
    %1449 = vsyncpa [#allocation12], 1
    %1450 = vsyncpa [#allocation15], 1
    %1451 = vsyncpa [#allocation4], 1
    %s1452 = scalar_lea.sflag [#allocation4], 1
    %1453 = vsyncpa %s1452, 1
    %1454 = vsyncpa [#allocation18], 1
    %s1455 = scalar_lea.sflag [#allocation18], 1
    %1456 = vsyncpa %s1455, 1
    %1457 = vsyncpa [#allocation21], 1
    %s1458 = scalar_lea.sflag [#allocation21], 1
    %1459 = vsyncpa %s1458, 1

</llo_original>
